<compile_context>
chip_gen: v5e
topology: v5e:2x2
jax: 0.10.0
libtpu: 0.0.40
codegen_flags: <defaults>
</compile_context>

<pallas_src>
import functools

import jax
import jax.numpy as jnp
from jax import lax
from jax.experimental import pallas as pl
from jax.experimental.pallas import tpu as pltpu


# ----------------------------------------------------------------------------
# Pallas kernel: fused bidirectional GRU.  Gridless; everything fits in VMEM.
# ----------------------------------------------------------------------------
def _birnn_kernel(T, Bp, Hp,
                  xf_ref,    # (T*Bp, I)   forward-time inputs, time-major
                  xb_ref,    # (T*Bp, I)   backward inputs, PRE-REVERSED in time
                  wf_ref,    # (I, 6Hp)    fwd W_ih in cols [r_f . z_f . n_f .], zeros elsewhere
                  wb_ref,    # (I, 6Hp)    bwd W_ih in cols [. r_b . z_b . n_b], zeros elsewhere
                  whh_ref,   # (2Hp, 6Hp)  block-diagonal recurrent weights, same column layout
                  bpre_ref,  # (1, 6Hp)    b_ih + [b_hh_r, b_hh_z, 0] per dir, interleaved
                  bhhn_ref,  # (1, 2Hp)    [b_hh_n_f | b_hh_n_b]
                  h0_ref,    # (Bp, 2Hp)   [h0_f | h0_b]
                  out_ref,   # (T*Bp, 2Hp) row block t = step t; cols [:Hp]=fwd, [Hp:]=bwd
                  gi_ref):   # (T*Bp, 6Hp) VMEM scratch for the hoisted projection
    H2, H4 = 2 * Hp, 4 * Hp

    # ---- hoisted, non-recurrent input projection (one pass, off the chain) ----
    # wf/wb carry zeros in the other direction's gate columns, so the sum lands
    # directly in the interleaved [r_f r_b z_f z_b n_f n_b] layout — no select.
    gi = (jnp.dot(xf_ref[...], wf_ref[...], preferred_element_type=jnp.float32)
          + jnp.dot(xb_ref[...], wb_ref[...], preferred_element_type=jnp.float32)
          + bpre_ref[...])
    gi_ref[...] = gi  # stage in scratch -> bounded live range inside the loop

    # hoisted broadcast (JAX does not CSE broadcast_in_dim inside the loop)
    bhhn = jnp.broadcast_to(bhhn_ref[...], (Bp, H2))

    def step(t, h):
        row = pl.multiple_of(t * Bp, Bp)
        gi_t = gi_ref[pl.ds(row, Bp), :]                              # (Bp, 6Hp)
        # single MXU push per fused step: both directions via block-diag W_hh
        gh = jnp.dot(h, whh_ref[...], preferred_element_type=jnp.float32)
        rz = jax.nn.sigmoid(gi_t[:, :H4] + gh[:, :H4])                # lane-aligned r|z, both dirs
        r = rz[:, :H2]
        z = rz[:, H2:]
        n = jnp.tanh(gi_t[:, H4:] + r * (gh[:, H4:] + bhhn))          # b_hh_n stays inside r*(.)
        h_new = jnp.tanh((1.0 - z) * n + z * h)                       # GRU update + extra tanh
        out_ref[pl.ds(row, Bp), :] = h_new                            # one full-width store/step
        return h_new

    lax.fori_loop(0, T, step, h0_ref[...], unroll=True if T <= 32 else 8)


# ----------------------------------------------------------------------------
# Parameter packing into the fused, padded kernel layout
# ----------------------------------------------------------------------------
def _round_up(n, m):
    return (n + m - 1) // m * m


def pack_params(p):
    """Raw PyTorch-style GRUCell params -> padded fused kernel layout."""
    B, H = p["h0_f"].shape
    I = p["wih_f_T"].shape[0]
    Hp = max(_round_up(H, 64), 64)   # 2*Hp multiple of 128 lanes
    Bp = _round_up(B, 8)             # f32 sublane multiple

    def gate_blocks(w, rows_p):
        # w: (rows, 3H), PyTorch gate order [r | z | n] -> three (rows_p, Hp) blocks
        rows = w.shape[0]
        return [jnp.pad(w[:, g * H:(g + 1) * H],
                        ((0, rows_p - rows), (0, Hp - H))) for g in range(3)]

    zI = jnp.zeros((I, Hp), jnp.float32)
    rf, zf, nf = gate_blocks(p["wih_f_T"], I)
    rb, zb, nb = gate_blocks(p["wih_b_T"], I)
    wih_f6 = jnp.concatenate([rf, zI, zf, zI, nf, zI], axis=1)        # (I, 6Hp)
    wih_b6 = jnp.concatenate([zI, rb, zI, zb, zI, nb], axis=1)        # (I, 6Hp)

    zH = jnp.zeros((Hp, Hp), jnp.float32)
    rf, zf, nf = gate_blocks(p["whh_f_T"], Hp)
    rb, zb, nb = gate_blocks(p["whh_b_T"], Hp)
    whh_bd = jnp.concatenate(
        [jnp.concatenate([rf, zH, zf, zH, nf, zH], axis=1),
         jnp.concatenate([zH, rb, zH, zb, zH, nb], axis=1)], axis=0)  # (2Hp, 6Hp)

    def bias_blocks(b):
        return [jnp.pad(b[:, g * H:(g + 1) * H], ((0, 0), (0, Hp - H))) for g in range(3)]

    brf, bzf, bnf = bias_blocks(p["bih_f"])
    brb, bzb, bnb = bias_blocks(p["bih_b"])
    hrf, hzf, hnf = bias_blocks(p["bhh_f"])
    hrb, hzb, hnb = bias_blocks(p["bhh_b"])
    # fold b_ih (all gates) + b_hh (r,z) into the hoisted projection bias
    bpre = jnp.concatenate([brf + hrf, brb + hrb,
                            bzf + hzf, bzb + hzb,
                            bnf, bnb], axis=1)                        # (1, 6Hp)
    bhhn = jnp.concatenate([hnf, hnb], axis=1)                        # (1, 2Hp)

    h0 = jnp.concatenate([jnp.pad(p["h0_f"], ((0, Bp - B), (0, Hp - H))),
                          jnp.pad(p["h0_b"], ((0, Bp - B), (0, Hp - H)))], axis=1)

    return {"wih_f6": wih_f6, "wih_b6": wih_b6, "whh_bd": whh_bd,
            "bpre": bpre, "bhhn": bhhn, "h0": h0,
            "H": H, "Hp": Hp, "B": B, "Bp": Bp, "I": I}


# ----------------------------------------------------------------------------
# Wrapper
# ----------------------------------------------------------------------------
def birnn_forward(x, lengths, packed, return_sequences=True):
    """x: (B, T, I) f32. lengths: python list/tuple of ints (len == B)."""
    B, T_total, I = x.shape
    H, Hp, Bp = packed["H"], packed["Hp"], packed["Bp"]
    assert packed["B"] == B and packed["I"] == I
    # NOTE: L is a Python int; distinct values recompile. Bucket/pad in production.
    L = int(max(lengths))

    # Forward consumes x[0..L-1]; backward consumes x[T-1..T-L].  The backward
    # slab is pre-reversed HERE so both directions read row-block t at step t
    # (no per-step select / reversed slicing inside the serial chain).
    xf = x[:, :L, :]
    xb = x[:, T_total - L:, :][:, ::-1, :]
    # TODO(synk): when L == T_total, xb == flip(xf); a single-x variant doing the
    # one-time reversal in-kernel would halve input traffic / projection FLOPs.

    def to_time_major(xs):  # (B, L, I) -> (L*Bp, I), batch zero-padded to Bp
        xt = jnp.transpose(xs, (1, 0, 2))
        xt = jnp.pad(xt, ((0, 0), (0, Bp - B), (0, 0)))
        return xt.reshape(L * Bp, I)

    xf_tm = to_time_major(xf)
    xb_tm = to_time_major(xb)
    # TODO(synk): for large L*B*I, feed x via a time-chunked grid + BlockSpec
    # index_map (and emit_pipeline the recurrence) instead of wrapper transposes.

    vmem = pl.BlockSpec(memory_space=pltpu.MemorySpace.VMEM)
    # size the scoped VMEM limit to the real buffers (default 16/32 MiB can be low)
    vmem_bytes = 4 * (2 * L * Bp * I          # xf, xb
                      + 2 * I * 6 * Hp        # wih_f6, wih_b6
                      + 12 * Hp * Hp          # whh_bd
                      + 8 * L * Bp * Hp       # gi scratch + out
                      + 8 * Bp * Hp)          # h0, biases, slack
    vmem_limit = int(min(max(2 * vmem_bytes + (2 << 20), 8 << 20), 64 << 20))

    kernel = functools.partial(_birnn_kernel, L, Bp, Hp)
    out2d = pl.pallas_call(
        kernel,
        out_shape=jax.ShapeDtypeStruct((L * Bp, 2 * Hp), jnp.float32),
        in_specs=[vmem] * 8,
        out_specs=vmem,
        scratch_shapes=[pltpu.VMEM((L * Bp, 6 * Hp), jnp.float32)],
        compiler_params=pltpu.CompilerParams(vmem_limit_bytes=vmem_limit),
    )(xf_tm, xb_tm, packed["wih_f6"], packed["wih_b6"], packed["whh_bd"],
      packed["bpre"], packed["bhhn"], packed["h0"])

    # Un-pad, un-reverse the backward half (single flip, outside the recurrence).
    out3 = out2d.reshape(L, Bp, 2 * Hp)
    fwd = out3[:, :B, :H]                       # (L, B, H) forward outputs at time t
    bwd = out3[::-1, :B, Hp:Hp + H]             # (L, B, H) backward outputs, time-restored
    out = jnp.transpose(jnp.concatenate([fwd, bwd], axis=-1), (1, 0, 2))  # (B, L, 2H)

    if return_sequences:
        return out
    idx = jnp.asarray(lengths, dtype=jnp.int32) - 1
    return out[jnp.arange(B), idx]              # (B, 2H)

    # TODO(synk): on v7x, split the two directions across the two TensorCores
    # (grid=(2,), dimension_semantics=("parallel",)) instead of the block-diag fusion.


# ----------------------------------------------------------------------------
# Deterministic raw parameters (PyTorch GRUCell shapes, pre-transposed)
# ----------------------------------------------------------------------------
def init_params(key, input_size, hidden_size, batch):
    H, I = hidden_size, input_size
    bound = 1.0 / jnp.sqrt(jnp.float32(H))
    keys = jax.random.split(key, 10)

    def u(k, shape):
        return jax.random.uniform(k, shape, jnp.float32, -bound, bound)

    return {
        "wih_f_T": u(keys[0], (3 * H, I)).T,   # (I, 3H)
        "whh_f_T": u(keys[1], (3 * H, H)).T,   # (H, 3H)
        "bih_f":   u(keys[2], (3 * H,)).reshape(1, 3 * H),
        "bhh_f":   u(keys[3], (3 * H,)).reshape(1, 3 * H),
        "wih_b_T": u(keys[4], (3 * H, I)).T,
        "whh_b_T": u(keys[5], (3 * H, H)).T,
        "bih_b":   u(keys[6], (3 * H,)).reshape(1, 3 * H),
        "bhh_b":   u(keys[7], (3 * H,)).reshape(1, 3 * H),
        # the module draws a fresh random h0 each call; here it is a fixed input
        "h0_f": jax.random.normal(keys[8], (batch, H), jnp.float32),
        "h0_b": jax.random.normal(keys[9], (batch, H), jnp.float32),
    }


# ----------------------------------------------------------------------------
# Pure-JAX reference (same math, raw params) for a sanity check
# ----------------------------------------------------------------------------
def birnn_reference(x, lengths, p):
    B, T_total, I = x.shape
    H = p["h0_f"].shape[1]
    L = int(max(lengths))

    def cell(x_t, h, wihT, whhT, bih, bhh):
        gi = x_t @ wihT + bih
        gh = h @ whhT + bhh
        r = jax.nn.sigmoid(gi[:, :H] + gh[:, :H])
        z = jax.nn.sigmoid(gi[:, H:2 * H] + gh[:, H:2 * H])
        n = jnp.tanh(gi[:, 2 * H:] + r * gh[:, 2 * H:])
        return jnp.tanh((1.0 - z) * n + z * h)

    xf = jnp.transpose(x[:, :L, :], (1, 0, 2))
    xb = jnp.transpose(x[:, T_total - L:, :], (1, 0, 2))

    def fwd_scan(h, x_t):
        h = cell(x_t, h, p["wih_f_T"], p["whh_f_T"], p["bih_f"], p["bhh_f"])
        return h, h

    def bwd_scan(h, x_t):
        h = cell(x_t, h, p["wih_b_T"], p["whh_b_T"], p["bih_b"], p["bhh_b"])
        return h, h

    _, of = lax.scan(fwd_scan, p["h0_f"], xf)
    _, ob = lax.scan(bwd_scan, p["h0_b"], xb[::-1])
    ob = ob[::-1]
    return jnp.concatenate(
        [jnp.transpose(of, (1, 0, 2)), jnp.transpose(ob, (1, 0, 2))], axis=2)


if __name__ == "__main__":
    # small shapes consistent with the module: batch=2, seq=8, input=16, hidden=32
    B, T, I, H = 2, 8, 16, 32
    key = jax.random.PRNGKey(0)
    k_x, k_p = jax.random.split(key)

    x = jax.random.normal(k_x, (B, T, I), jnp.float32)
    lengths = [T, T - 2]           # max_len = T
    raw = init_params(k_p, I, H, B)
    packed = pack_params(raw)

    out = birnn_forward(x, lengths, packed, return_sequences=True)
    out = jax.block_until_ready(out)
    assert out.shape == (B, max(lengths), 2 * H), out.shape

    ref = jax.block_until_ready(birnn_reference(x, lengths, raw))
    # tolerance accounts for TPU default (bf16-pass) MXU precision differences
    # between the fused kernel matmuls and the XLA reference matmuls; wiring
    # bugs produce O(0.1..1) errors and are still caught.
    err = float(jnp.max(jnp.abs(out - ref)))
    assert err < 2e-2, f"mismatch vs reference: max abs err {err}"

    print("KERNEL_OK")
</pallas_src>

<mosaic_0001>
module attributes {stable_mosaic.version = 11 : i64} {
  func.func @_birnn_kernel(%arg0: memref<64x16xf32, #tpu.memory_space<vmem>>, %arg1: memref<64x16xf32, #tpu.memory_space<vmem>>, %arg2: memref<16x384xf32, #tpu.memory_space<vmem>>, %arg3: memref<16x384xf32, #tpu.memory_space<vmem>>, %arg4: memref<128x384xf32, #tpu.memory_space<vmem>>, %arg5: memref<1x384xf32, #tpu.memory_space<vmem>>, %arg6: memref<1x128xf32, #tpu.memory_space<vmem>>, %arg7: memref<8x128xf32, #tpu.memory_space<vmem>>, %arg8: memref<64x128xf32, #tpu.memory_space<vmem>>, %arg9: memref<64x384xf32, #tpu.memory_space<vmem>>) attributes {dimension_semantics = [], scalar_prefetch = 0 : i64, scratch_operands = 1 : i64, tpu.core_type = #tpu.core_type<tc>} {
    %c0 = arith.constant 0 : index
    %c0_0 = arith.constant 0 : index
    %0 = vector.load %arg0[%c0, %c0_0] : memref<64x16xf32, #tpu.memory_space<vmem>>, vector<64x16xf32>
    %c0_1 = arith.constant 0 : index
    %c0_2 = arith.constant 0 : index
    %1 = vector.load %arg2[%c0_1, %c0_2] : memref<16x384xf32, #tpu.memory_space<vmem>>, vector<16x384xf32>
    %cst = arith.constant dense<0.000000e+00> : vector<64x384xf32>
    %2 = tpu.matmul %0, %1, %cst {dimension_numbers = #tpu.dot_dimension_numbers<[1], [0], [0], [1], [0, 0, 1, 1], [], []>} : vector<64x16xf32>, vector<16x384xf32>, vector<64x384xf32> -> vector<64x384xf32>
    %c0_3 = arith.constant 0 : index
    %c0_4 = arith.constant 0 : index
    %3 = vector.load %arg1[%c0_3, %c0_4] : memref<64x16xf32, #tpu.memory_space<vmem>>, vector<64x16xf32>
    %c0_5 = arith.constant 0 : index
    %c0_6 = arith.constant 0 : index
    %4 = vector.load %arg3[%c0_5, %c0_6] : memref<16x384xf32, #tpu.memory_space<vmem>>, vector<16x384xf32>
    %cst_7 = arith.constant dense<0.000000e+00> : vector<64x384xf32>
    %5 = tpu.matmul %3, %4, %cst_7 {dimension_numbers = #tpu.dot_dimension_numbers<[1], [0], [0], [1], [0, 0, 1, 1], [], []>} : vector<64x16xf32>, vector<16x384xf32>, vector<64x384xf32> -> vector<64x384xf32>
    %6 = arith.addf %2, %5 : vector<64x384xf32>
    %c0_8 = arith.constant 0 : index
    %c0_9 = arith.constant 0 : index
    %7 = vector.load %arg5[%c0_8, %c0_9] : memref<1x384xf32, #tpu.memory_space<vmem>>, vector<1x384xf32>
    %8 = vector.broadcast %7 : vector<1x384xf32> to vector<64x384xf32>
    %9 = arith.addf %6, %8 : vector<64x384xf32>
    %c0_10 = arith.constant 0 : index
    %c0_11 = arith.constant 0 : index
    %10 = vector.load %arg9[%c0_10, %c0_11] : memref<64x384xf32, #tpu.memory_space<vmem>>, vector<64x384xf32>
    tpu.vector_store %arg9[%c0_10, %c0_11], %9 {strides = array<i32>} : memref<64x384xf32, #tpu.memory_space<vmem>>, vector<64x384xf32>,
    %c0_12 = arith.constant 0 : index
    %c0_13 = arith.constant 0 : index
    %11 = vector.load %arg6[%c0_12, %c0_13] : memref<1x128xf32, #tpu.memory_space<vmem>>, vector<1x128xf32>
    %12 = vector.shape_cast %11 : vector<1x128xf32> to vector<1x128xf32>
    %13 = vector.broadcast %12 : vector<1x128xf32> to vector<8x128xf32>
    %c0_14 = arith.constant 0 : index
    %c0_15 = arith.constant 0 : index
    %14 = vector.load %arg7[%c0_14, %c0_15] : memref<8x128xf32, #tpu.memory_space<vmem>>, vector<8x128xf32>
    %c0_i32 = arith.constant 0 : i32
    %c8_i32 = arith.constant 8 : i32
    %15 = arith.muli %c0_i32, %c8_i32 : i32
    %16 = tpu.assume_multiple %15, 8 : i32
    %17 = arith.index_cast %16 : i32 to index
    %c0_16 = arith.constant 0 : index
    %18 = vector.load %arg9[%17, %c0_16] : memref<64x384xf32, #tpu.memory_space<vmem>>, vector<8x384xf32>
    %c0_17 = arith.constant 0 : index
    %c0_18 = arith.constant 0 : index
    %19 = vector.load %arg4[%c0_17, %c0_18] : memref<128x384xf32, #tpu.memory_space<vmem>>, vector<128x384xf32>
    %cst_19 = arith.constant dense<0.000000e+00> : vector<8x384xf32>
    %20 = tpu.matmul %14, %19, %cst_19 {dimension_numbers = #tpu.dot_dimension_numbers<[1], [0], [0], [1], [0, 0, 1, 1], [], []>} : vector<8x128xf32>, vector<128x384xf32>, vector<8x384xf32> -> vector<8x384xf32>
    %21 = vector.extract_strided_slice %18 {offsets = [0, 0], sizes = [8, 256], strides = [1, 1]} : vector<8x384xf32> to vector<8x256xf32>
    %22 = vector.extract_strided_slice %20 {offsets = [0, 0], sizes = [8, 256], strides = [1, 1]} : vector<8x384xf32> to vector<8x256xf32>
    %23 = arith.addf %21, %22 : vector<8x256xf32>
    %24 = arith.negf %23 : vector<8x256xf32>
    %25 = math.exp %24 : vector<8x256xf32>
    %cst_20 = arith.constant 1.000000e+00 : f32
    %26 = vector.broadcast %cst_20 : f32 to vector<8x256xf32>
    %27 = arith.addf %26, %25 : vector<8x256xf32>
    %28 = arith.divf %26, %27 : vector<8x256xf32>
    %29 = vector.extract_strided_slice %28 {offsets = [0, 0], sizes = [8, 128], strides = [1, 1]} : vector<8x256xf32> to vector<8x128xf32>
    %30 = vector.extract_strided_slice %28 {offsets = [0, 128], sizes = [8, 128], strides = [1, 1]} : vector<8x256xf32> to vector<8x128xf32>
    %31 = vector.extract_strided_slice %18 {offsets = [0, 256], sizes = [8, 128], strides = [1, 1]} : vector<8x384xf32> to vector<8x128xf32>
    %32 = vector.extract_strided_slice %20 {offsets = [0, 256], sizes = [8, 128], strides = [1, 1]} : vector<8x384xf32> to vector<8x128xf32>
    %33 = arith.addf %32, %13 : vector<8x128xf32>
    %34 = arith.mulf %29, %33 : vector<8x128xf32>
    %35 = arith.addf %31, %34 : vector<8x128xf32>
    %36 = math.tanh %35 : vector<8x128xf32>
    %cst_21 = arith.constant 1.000000e+00 : f32
    %37 = vector.broadcast %cst_21 : f32 to vector<8x128xf32>
    %38 = arith.subf %37, %30 : vector<8x128xf32>
    %39 = arith.mulf %38, %36 : vector<8x128xf32>
    %40 = arith.mulf %30, %14 : vector<8x128xf32>
    %41 = arith.addf %39, %40 : vector<8x128xf32>
    %42 = math.tanh %41 : vector<8x128xf32>
    %43 = arith.index_cast %16 : i32 to index
    %c0_22 = arith.constant 0 : index
    %44 = vector.load %arg8[%43, %c0_22] : memref<64x128xf32, #tpu.memory_space<vmem>>, vector<8x128xf32>
    tpu.vector_store %arg8[%43, %c0_22], %42 {strides = array<i32>} : memref<64x128xf32, #tpu.memory_space<vmem>>, vector<8x128xf32>,
    %c1_i32 = arith.constant 1 : i32
    %c8_i32_23 = arith.constant 8 : i32
    %45 = arith.muli %c1_i32, %c8_i32_23 : i32
    %46 = tpu.assume_multiple %45, 8 : i32
    %47 = arith.index_cast %46 : i32 to index
    %c0_24 = arith.constant 0 : index
    %48 = vector.load %arg9[%47, %c0_24] : memref<64x384xf32, #tpu.memory_space<vmem>>, vector<8x384xf32>
    %c0_25 = arith.constant 0 : index
    %c0_26 = arith.constant 0 : index
    %49 = vector.load %arg4[%c0_25, %c0_26] : memref<128x384xf32, #tpu.memory_space<vmem>>, vector<128x384xf32>
    %cst_27 = arith.constant dense<0.000000e+00> : vector<8x384xf32>
    %50 = tpu.matmul %42, %49, %cst_27 {dimension_numbers = #tpu.dot_dimension_numbers<[1], [0], [0], [1], [0, 0, 1, 1], [], []>} : vector<8x128xf32>, vector<128x384xf32>, vector<8x384xf32> -> vector<8x384xf32>
    %51 = vector.extract_strided_slice %48 {offsets = [0, 0], sizes = [8, 256], strides = [1, 1]} : vector<8x384xf32> to vector<8x256xf32>
    %52 = vector.extract_strided_slice %50 {offsets = [0, 0], sizes = [8, 256], strides = [1, 1]} : vector<8x384xf32> to vector<8x256xf32>
    %53 = arith.addf %51, %52 : vector<8x256xf32>
    %54 = arith.negf %53 : vector<8x256xf32>
    %55 = math.exp %54 : vector<8x256xf32>
    %cst_28 = arith.constant 1.000000e+00 : f32
    %56 = vector.broadcast %cst_28 : f32 to vector<8x256xf32>
    %57 = arith.addf %56, %55 : vector<8x256xf32>
    %58 = arith.divf %56, %57 : vector<8x256xf32>
    %59 = vector.extract_strided_slice %58 {offsets = [0, 0], sizes = [8, 128], strides = [1, 1]} : vector<8x256xf32> to vector<8x128xf32>
    %60 = vector.extract_strided_slice %58 {offsets = [0, 128], sizes = [8, 128], strides = [1, 1]} : vector<8x256xf32> to vector<8x128xf32>
    %61 = vector.extract_strided_slice %48 {offsets = [0, 256], sizes = [8, 128], strides = [1, 1]} : vector<8x384xf32> to vector<8x128xf32>
    %62 = vector.extract_strided_slice %50 {offsets = [0, 256], sizes = [8, 128], strides = [1, 1]} : vector<8x384xf32> to vector<8x128xf32>
    %63 = arith.addf %62, %13 : vector<8x128xf32>
    %64 = arith.mulf %59, %63 : vector<8x128xf32>
    %65 = arith.addf %61, %64 : vector<8x128xf32>
    %66 = math.tanh %65 : vector<8x128xf32>
    %cst_29 = arith.constant 1.000000e+00 : f32
    %67 = vector.broadcast %cst_29 : f32 to vector<8x128xf32>
    %68 = arith.subf %67, %60 : vector<8x128xf32>
    %69 = arith.mulf %68, %66 : vector<8x128xf32>
    %70 = arith.mulf %60, %42 : vector<8x128xf32>
    %71 = arith.addf %69, %70 : vector<8x128xf32>
    %72 = math.tanh %71 : vector<8x128xf32>
    %73 = arith.index_cast %46 : i32 to index
    %c0_30 = arith.constant 0 : index
    %74 = vector.load %arg8[%73, %c0_30] : memref<64x128xf32, #tpu.memory_space<vmem>>, vector<8x128xf32>
    tpu.vector_store %arg8[%73, %c0_30], %72 {strides = array<i32>} : memref<64x128xf32, #tpu.memory_space<vmem>>, vector<8x128xf32>,
    %c2_i32 = arith.constant 2 : i32
    %c8_i32_31 = arith.constant 8 : i32
    %75 = arith.muli %c2_i32, %c8_i32_31 : i32
    %76 = tpu.assume_multiple %75, 8 : i32
    %77 = arith.index_cast %76 : i32 to index
    %c0_32 = arith.constant 0 : index
    %78 = vector.load %arg9[%77, %c0_32] : memref<64x384xf32, #tpu.memory_space<vmem>>, vector<8x384xf32>
    %c0_33 = arith.constant 0 : index
    %c0_34 = arith.constant 0 : index
    %79 = vector.load %arg4[%c0_33, %c0_34] : memref<128x384xf32, #tpu.memory_space<vmem>>, vector<128x384xf32>
    %cst_35 = arith.constant dense<0.000000e+00> : vector<8x384xf32>
    %80 = tpu.matmul %72, %79, %cst_35 {dimension_numbers = #tpu.dot_dimension_numbers<[1], [0], [0], [1], [0, 0, 1, 1], [], []>} : vector<8x128xf32>, vector<128x384xf32>, vector<8x384xf32> -> vector<8x384xf32>
    %81 = vector.extract_strided_slice %78 {offsets = [0, 0], sizes = [8, 256], strides = [1, 1]} : vector<8x384xf32> to vector<8x256xf32>
    %82 = vector.extract_strided_slice %80 {offsets = [0, 0], sizes = [8, 256], strides = [1, 1]} : vector<8x384xf32> to vector<8x256xf32>
    %83 = arith.addf %81, %82 : vector<8x256xf32>
    %84 = arith.negf %83 : vector<8x256xf32>
    %85 = math.exp %84 : vector<8x256xf32>
    %cst_36 = arith.constant 1.000000e+00 : f32
    %86 = vector.broadcast %cst_36 : f32 to vector<8x256xf32>
    %87 = arith.addf %86, %85 : vector<8x256xf32>
    %88 = arith.divf %86, %87 : vector<8x256xf32>
    %89 = vector.extract_strided_slice %88 {offsets = [0, 0], sizes = [8, 128], strides = [1, 1]} : vector<8x256xf32> to vector<8x128xf32>
    %90 = vector.extract_strided_slice %88 {offsets = [0, 128], sizes = [8, 128], strides = [1, 1]} : vector<8x256xf32> to vector<8x128xf32>
    %91 = vector.extract_strided_slice %78 {offsets = [0, 256], sizes = [8, 128], strides = [1, 1]} : vector<8x384xf32> to vector<8x128xf32>
    %92 = vector.extract_strided_slice %80 {offsets = [0, 256], sizes = [8, 128], strides = [1, 1]} : vector<8x384xf32> to vector<8x128xf32>
    %93 = arith.addf %92, %13 : vector<8x128xf32>
    %94 = arith.mulf %89, %93 : vector<8x128xf32>
    %95 = arith.addf %91, %94 : vector<8x128xf32>
    %96 = math.tanh %95 : vector<8x128xf32>
    %cst_37 = arith.constant 1.000000e+00 : f32
    %97 = vector.broadcast %cst_37 : f32 to vector<8x128xf32>
    %98 = arith.subf %97, %90 : vector<8x128xf32>
    %99 = arith.mulf %98, %96 : vector<8x128xf32>
    %100 = arith.mulf %90, %72 : vector<8x128xf32>
    %101 = arith.addf %99, %100 : vector<8x128xf32>
    %102 = math.tanh %101 : vector<8x128xf32>
    %103 = arith.index_cast %76 : i32 to index
    %c0_38 = arith.constant 0 : index
    %104 = vector.load %arg8[%103, %c0_38] : memref<64x128xf32, #tpu.memory_space<vmem>>, vector<8x128xf32>
    tpu.vector_store %arg8[%103, %c0_38], %102 {strides = array<i32>} : memref<64x128xf32, #tpu.memory_space<vmem>>, vector<8x128xf32>,
    %c3_i32 = arith.constant 3 : i32
    %c8_i32_39 = arith.constant 8 : i32
    %105 = arith.muli %c3_i32, %c8_i32_39 : i32
    %106 = tpu.assume_multiple %105, 8 : i32
    %107 = arith.index_cast %106 : i32 to index
    %c0_40 = arith.constant 0 : index
    %108 = vector.load %arg9[%107, %c0_40] : memref<64x384xf32, #tpu.memory_space<vmem>>, vector<8x384xf32>
    %c0_41 = arith.constant 0 : index
    %c0_42 = arith.constant 0 : index
    %109 = vector.load %arg4[%c0_41, %c0_42] : memref<128x384xf32, #tpu.memory_space<vmem>>, vector<128x384xf32>
    %cst_43 = arith.constant dense<0.000000e+00> : vector<8x384xf32>
    %110 = tpu.matmul %102, %109, %cst_43 {dimension_numbers = #tpu.dot_dimension_numbers<[1], [0], [0], [1], [0, 0, 1, 1], [], []>} : vector<8x128xf32>, vector<128x384xf32>, vector<8x384xf32> -> vector<8x384xf32>
    %111 = vector.extract_strided_slice %108 {offsets = [0, 0], sizes = [8, 256], strides = [1, 1]} : vector<8x384xf32> to vector<8x256xf32>
    %112 = vector.extract_strided_slice %110 {offsets = [0, 0], sizes = [8, 256], strides = [1, 1]} : vector<8x384xf32> to vector<8x256xf32>
    %113 = arith.addf %111, %112 : vector<8x256xf32>
    %114 = arith.negf %113 : vector<8x256xf32>
    %115 = math.exp %114 : vector<8x256xf32>
    %cst_44 = arith.constant 1.000000e+00 : f32
    %116 = vector.broadcast %cst_44 : f32 to vector<8x256xf32>
    %117 = arith.addf %116, %115 : vector<8x256xf32>
    %118 = arith.divf %116, %117 : vector<8x256xf32>
    %119 = vector.extract_strided_slice %118 {offsets = [0, 0], sizes = [8, 128], strides = [1, 1]} : vector<8x256xf32> to vector<8x128xf32>
    %120 = vector.extract_strided_slice %118 {offsets = [0, 128], sizes = [8, 128], strides = [1, 1]} : vector<8x256xf32> to vector<8x128xf32>
    %121 = vector.extract_strided_slice %108 {offsets = [0, 256], sizes = [8, 128], strides = [1, 1]} : vector<8x384xf32> to vector<8x128xf32>
    %122 = vector.extract_strided_slice %110 {offsets = [0, 256], sizes = [8, 128], strides = [1, 1]} : vector<8x384xf32> to vector<8x128xf32>
    %123 = arith.addf %122, %13 : vector<8x128xf32>
    %124 = arith.mulf %119, %123 : vector<8x128xf32>
    %125 = arith.addf %121, %124 : vector<8x128xf32>
    %126 = math.tanh %125 : vector<8x128xf32>
    %cst_45 = arith.constant 1.000000e+00 : f32
    %127 = vector.broadcast %cst_45 : f32 to vector<8x128xf32>
    %128 = arith.subf %127, %120 : vector<8x128xf32>
    %129 = arith.mulf %128, %126 : vector<8x128xf32>
    %130 = arith.mulf %120, %102 : vector<8x128xf32>
    %131 = arith.addf %129, %130 : vector<8x128xf32>
    %132 = math.tanh %131 : vector<8x128xf32>
    %133 = arith.index_cast %106 : i32 to index
    %c0_46 = arith.constant 0 : index
    %134 = vector.load %arg8[%133, %c0_46] : memref<64x128xf32, #tpu.memory_space<vmem>>, vector<8x128xf32>
    tpu.vector_store %arg8[%133, %c0_46], %132 {strides = array<i32>} : memref<64x128xf32, #tpu.memory_space<vmem>>, vector<8x128xf32>,
    %c4_i32 = arith.constant 4 : i32
    %c8_i32_47 = arith.constant 8 : i32
    %135 = arith.muli %c4_i32, %c8_i32_47 : i32
    %136 = tpu.assume_multiple %135, 8 : i32
    %137 = arith.index_cast %136 : i32 to index
    %c0_48 = arith.constant 0 : index
    %138 = vector.load %arg9[%137, %c0_48] : memref<64x384xf32, #tpu.memory_space<vmem>>, vector<8x384xf32>
    %c0_49 = arith.constant 0 : index
    %c0_50 = arith.constant 0 : index
    %139 = vector.load %arg4[%c0_49, %c0_50] : memref<128x384xf32, #tpu.memory_space<vmem>>, vector<128x384xf32>
    %cst_51 = arith.constant dense<0.000000e+00> : vector<8x384xf32>
    %140 = tpu.matmul %132, %139, %cst_51 {dimension_numbers = #tpu.dot_dimension_numbers<[1], [0], [0], [1], [0, 0, 1, 1], [], []>} : vector<8x128xf32>, vector<128x384xf32>, vector<8x384xf32> -> vector<8x384xf32>
    %141 = vector.extract_strided_slice %138 {offsets = [0, 0], sizes = [8, 256], strides = [1, 1]} : vector<8x384xf32> to vector<8x256xf32>
    %142 = vector.extract_strided_slice %140 {offsets = [0, 0], sizes = [8, 256], strides = [1, 1]} : vector<8x384xf32> to vector<8x256xf32>
    %143 = arith.addf %141, %142 : vector<8x256xf32>
    %144 = arith.negf %143 : vector<8x256xf32>
    %145 = math.exp %144 : vector<8x256xf32>
    %cst_52 = arith.constant 1.000000e+00 : f32
    %146 = vector.broadcast %cst_52 : f32 to vector<8x256xf32>
    %147 = arith.addf %146, %145 : vector<8x256xf32>
    %148 = arith.divf %146, %147 : vector<8x256xf32>
    %149 = vector.extract_strided_slice %148 {offsets = [0, 0], sizes = [8, 128], strides = [1, 1]} : vector<8x256xf32> to vector<8x128xf32>
    %150 = vector.extract_strided_slice %148 {offsets = [0, 128], sizes = [8, 128], strides = [1, 1]} : vector<8x256xf32> to vector<8x128xf32>
    %151 = vector.extract_strided_slice %138 {offsets = [0, 256], sizes = [8, 128], strides = [1, 1]} : vector<8x384xf32> to vector<8x128xf32>
    %152 = vector.extract_strided_slice %140 {offsets = [0, 256], sizes = [8, 128], strides = [1, 1]} : vector<8x384xf32> to vector<8x128xf32>
    %153 = arith.addf %152, %13 : vector<8x128xf32>
    %154 = arith.mulf %149, %153 : vector<8x128xf32>
    %155 = arith.addf %151, %154 : vector<8x128xf32>
    %156 = math.tanh %155 : vector<8x128xf32>
    %cst_53 = arith.constant 1.000000e+00 : f32
    %157 = vector.broadcast %cst_53 : f32 to vector<8x128xf32>
    %158 = arith.subf %157, %150 : vector<8x128xf32>
    %159 = arith.mulf %158, %156 : vector<8x128xf32>
    %160 = arith.mulf %150, %132 : vector<8x128xf32>
    %161 = arith.addf %159, %160 : vector<8x128xf32>
    %162 = math.tanh %161 : vector<8x128xf32>
    %163 = arith.index_cast %136 : i32 to index
    %c0_54 = arith.constant 0 : index
    %164 = vector.load %arg8[%163, %c0_54] : memref<64x128xf32, #tpu.memory_space<vmem>>, vector<8x128xf32>
    tpu.vector_store %arg8[%163, %c0_54], %162 {strides = array<i32>} : memref<64x128xf32, #tpu.memory_space<vmem>>, vector<8x128xf32>,
    %c5_i32 = arith.constant 5 : i32
    %c8_i32_55 = arith.constant 8 : i32
    %165 = arith.muli %c5_i32, %c8_i32_55 : i32
    %166 = tpu.assume_multiple %165, 8 : i32
    %167 = arith.index_cast %166 : i32 to index
    %c0_56 = arith.constant 0 : index
    %168 = vector.load %arg9[%167, %c0_56] : memref<64x384xf32, #tpu.memory_space<vmem>>, vector<8x384xf32>
    %c0_57 = arith.constant 0 : index
    %c0_58 = arith.constant 0 : index
    %169 = vector.load %arg4[%c0_57, %c0_58] : memref<128x384xf32, #tpu.memory_space<vmem>>, vector<128x384xf32>
    %cst_59 = arith.constant dense<0.000000e+00> : vector<8x384xf32>
    %170 = tpu.matmul %162, %169, %cst_59 {dimension_numbers = #tpu.dot_dimension_numbers<[1], [0], [0], [1], [0, 0, 1, 1], [], []>} : vector<8x128xf32>, vector<128x384xf32>, vector<8x384xf32> -> vector<8x384xf32>
    %171 = vector.extract_strided_slice %168 {offsets = [0, 0], sizes = [8, 256], strides = [1, 1]} : vector<8x384xf32> to vector<8x256xf32>
    %172 = vector.extract_strided_slice %170 {offsets = [0, 0], sizes = [8, 256], strides = [1, 1]} : vector<8x384xf32> to vector<8x256xf32>
    %173 = arith.addf %171, %172 : vector<8x256xf32>
    %174 = arith.negf %173 : vector<8x256xf32>
    %175 = math.exp %174 : vector<8x256xf32>
    %cst_60 = arith.constant 1.000000e+00 : f32
    %176 = vector.broadcast %cst_60 : f32 to vector<8x256xf32>
    %177 = arith.addf %176, %175 : vector<8x256xf32>
    %178 = arith.divf %176, %177 : vector<8x256xf32>
    %179 = vector.extract_strided_slice %178 {offsets = [0, 0], sizes = [8, 128], strides = [1, 1]} : vector<8x256xf32> to vector<8x128xf32>
    %180 = vector.extract_strided_slice %178 {offsets = [0, 128], sizes = [8, 128], strides = [1, 1]} : vector<8x256xf32> to vector<8x128xf32>
    %181 = vector.extract_strided_slice %168 {offsets = [0, 256], sizes = [8, 128], strides = [1, 1]} : vector<8x384xf32> to vector<8x128xf32>
    %182 = vector.extract_strided_slice %170 {offsets = [0, 256], sizes = [8, 128], strides = [1, 1]} : vector<8x384xf32> to vector<8x128xf32>
    %183 = arith.addf %182, %13 : vector<8x128xf32>
    %184 = arith.mulf %179, %183 : vector<8x128xf32>
    %185 = arith.addf %181, %184 : vector<8x128xf32>
    %186 = math.tanh %185 : vector<8x128xf32>
    %cst_61 = arith.constant 1.000000e+00 : f32
    %187 = vector.broadcast %cst_61 : f32 to vector<8x128xf32>
    %188 = arith.subf %187, %180 : vector<8x128xf32>
    %189 = arith.mulf %188, %186 : vector<8x128xf32>
    %190 = arith.mulf %180, %162 : vector<8x128xf32>
    %191 = arith.addf %189, %190 : vector<8x128xf32>
    %192 = math.tanh %191 : vector<8x128xf32>
    %193 = arith.index_cast %166 : i32 to index
    %c0_62 = arith.constant 0 : index
    %194 = vector.load %arg8[%193, %c0_62] : memref<64x128xf32, #tpu.memory_space<vmem>>, vector<8x128xf32>
    tpu.vector_store %arg8[%193, %c0_62], %192 {strides = array<i32>} : memref<64x128xf32, #tpu.memory_space<vmem>>, vector<8x128xf32>,
    %c6_i32 = arith.constant 6 : i32
    %c8_i32_63 = arith.constant 8 : i32
    %195 = arith.muli %c6_i32, %c8_i32_63 : i32
    %196 = tpu.assume_multiple %195, 8 : i32
    %197 = arith.index_cast %196 : i32 to index
    %c0_64 = arith.constant 0 : index
    %198 = vector.load %arg9[%197, %c0_64] : memref<64x384xf32, #tpu.memory_space<vmem>>, vector<8x384xf32>
    %c0_65 = arith.constant 0 : index
    %c0_66 = arith.constant 0 : index
    %199 = vector.load %arg4[%c0_65, %c0_66] : memref<128x384xf32, #tpu.memory_space<vmem>>, vector<128x384xf32>
    %cst_67 = arith.constant dense<0.000000e+00> : vector<8x384xf32>
    %200 = tpu.matmul %192, %199, %cst_67 {dimension_numbers = #tpu.dot_dimension_numbers<[1], [0], [0], [1], [0, 0, 1, 1], [], []>} : vector<8x128xf32>, vector<128x384xf32>, vector<8x384xf32> -> vector<8x384xf32>
    %201 = vector.extract_strided_slice %198 {offsets = [0, 0], sizes = [8, 256], strides = [1, 1]} : vector<8x384xf32> to vector<8x256xf32>
    %202 = vector.extract_strided_slice %200 {offsets = [0, 0], sizes = [8, 256], strides = [1, 1]} : vector<8x384xf32> to vector<8x256xf32>
    %203 = arith.addf %201, %202 : vector<8x256xf32>
    %204 = arith.negf %203 : vector<8x256xf32>
    %205 = math.exp %204 : vector<8x256xf32>
    %cst_68 = arith.constant 1.000000e+00 : f32
    %206 = vector.broadcast %cst_68 : f32 to vector<8x256xf32>
    %207 = arith.addf %206, %205 : vector<8x256xf32>
    %208 = arith.divf %206, %207 : vector<8x256xf32>
    %209 = vector.extract_strided_slice %208 {offsets = [0, 0], sizes = [8, 128], strides = [1, 1]} : vector<8x256xf32> to vector<8x128xf32>
    %210 = vector.extract_strided_slice %208 {offsets = [0, 128], sizes = [8, 128], strides = [1, 1]} : vector<8x256xf32> to vector<8x128xf32>
    %211 = vector.extract_strided_slice %198 {offsets = [0, 256], sizes = [8, 128], strides = [1, 1]} : vector<8x384xf32> to vector<8x128xf32>
    %212 = vector.extract_strided_slice %200 {offsets = [0, 256], sizes = [8, 128], strides = [1, 1]} : vector<8x384xf32> to vector<8x128xf32>
    %213 = arith.addf %212, %13 : vector<8x128xf32>
    %214 = arith.mulf %209, %213 : vector<8x128xf32>
    %215 = arith.addf %211, %214 : vector<8x128xf32>
    %216 = math.tanh %215 : vector<8x128xf32>
    %cst_69 = arith.constant 1.000000e+00 : f32
    %217 = vector.broadcast %cst_69 : f32 to vector<8x128xf32>
    %218 = arith.subf %217, %210 : vector<8x128xf32>
    %219 = arith.mulf %218, %216 : vector<8x128xf32>
    %220 = arith.mulf %210, %192 : vector<8x128xf32>
    %221 = arith.addf %219, %220 : vector<8x128xf32>
    %222 = math.tanh %221 : vector<8x128xf32>
    %223 = arith.index_cast %196 : i32 to index
    %c0_70 = arith.constant 0 : index
    %224 = vector.load %arg8[%223, %c0_70] : memref<64x128xf32, #tpu.memory_space<vmem>>, vector<8x128xf32>
    tpu.vector_store %arg8[%223, %c0_70], %222 {strides = array<i32>} : memref<64x128xf32, #tpu.memory_space<vmem>>, vector<8x128xf32>,
    %c7_i32 = arith.constant 7 : i32
    %c8_i32_71 = arith.constant 8 : i32
    %225 = arith.muli %c7_i32, %c8_i32_71 : i32
    %226 = tpu.assume_multiple %225, 8 : i32
    %227 = arith.index_cast %226 : i32 to index
    %c0_72 = arith.constant 0 : index
    %228 = vector.load %arg9[%227, %c0_72] : memref<64x384xf32, #tpu.memory_space<vmem>>, vector<8x384xf32>
    %c0_73 = arith.constant 0 : index
    %c0_74 = arith.constant 0 : index
    %229 = vector.load %arg4[%c0_73, %c0_74] : memref<128x384xf32, #tpu.memory_space<vmem>>, vector<128x384xf32>
    %cst_75 = arith.constant dense<0.000000e+00> : vector<8x384xf32>
    %230 = tpu.matmul %222, %229, %cst_75 {dimension_numbers = #tpu.dot_dimension_numbers<[1], [0], [0], [1], [0, 0, 1, 1], [], []>} : vector<8x128xf32>, vector<128x384xf32>, vector<8x384xf32> -> vector<8x384xf32>
    %231 = vector.extract_strided_slice %228 {offsets = [0, 0], sizes = [8, 256], strides = [1, 1]} : vector<8x384xf32> to vector<8x256xf32>
    %232 = vector.extract_strided_slice %230 {offsets = [0, 0], sizes = [8, 256], strides = [1, 1]} : vector<8x384xf32> to vector<8x256xf32>
    %233 = arith.addf %231, %232 : vector<8x256xf32>
    %234 = arith.negf %233 : vector<8x256xf32>
    %235 = math.exp %234 : vector<8x256xf32>
    %cst_76 = arith.constant 1.000000e+00 : f32
    %236 = vector.broadcast %cst_76 : f32 to vector<8x256xf32>
    %237 = arith.addf %236, %235 : vector<8x256xf32>
    %238 = arith.divf %236, %237 : vector<8x256xf32>
    %239 = vector.extract_strided_slice %238 {offsets = [0, 0], sizes = [8, 128], strides = [1, 1]} : vector<8x256xf32> to vector<8x128xf32>
    %240 = vector.extract_strided_slice %238 {offsets = [0, 128], sizes = [8, 128], strides = [1, 1]} : vector<8x256xf32> to vector<8x128xf32>
    %241 = vector.extract_strided_slice %228 {offsets = [0, 256], sizes = [8, 128], strides = [1, 1]} : vector<8x384xf32> to vector<8x128xf32>
    %242 = vector.extract_strided_slice %230 {offsets = [0, 256], sizes = [8, 128], strides = [1, 1]} : vector<8x384xf32> to vector<8x128xf32>
    %243 = arith.addf %242, %13 : vector<8x128xf32>
    %244 = arith.mulf %239, %243 : vector<8x128xf32>
    %245 = arith.addf %241, %244 : vector<8x128xf32>
    %246 = math.tanh %245 : vector<8x128xf32>
    %cst_77 = arith.constant 1.000000e+00 : f32
    %247 = vector.broadcast %cst_77 : f32 to vector<8x128xf32>
    %248 = arith.subf %247, %240 : vector<8x128xf32>
    %249 = arith.mulf %248, %246 : vector<8x128xf32>
    %250 = arith.mulf %240, %222 : vector<8x128xf32>
    %251 = arith.addf %249, %250 : vector<8x128xf32>
    %252 = math.tanh %251 : vector<8x128xf32>
    %253 = arith.index_cast %226 : i32 to index
    %c0_78 = arith.constant 0 : index
    %254 = vector.load %arg8[%253, %c0_78] : memref<64x128xf32, #tpu.memory_space<vmem>>, vector<8x128xf32>
    tpu.vector_store %arg8[%253, %c0_78], %252 {strides = array<i32>} : memref<64x128xf32, #tpu.memory_space<vmem>>, vector<8x128xf32>,
    %c8_i32_79 = arith.constant 8 : i32
    return
  }
}

</mosaic_0001>

<llo_original>
// kernel: tpu_custom_call.1
$region0: #{tpu_custom_call.1}
  #allocation0 [shape = 'u32[]', space=smem, size = 0x4, offset = 0x4, fixed_abs, tag = 'smem constant byte address 0x4 - core index']
  #allocation1 [shape = 'u32[72,128]{1,0:T(1,128)}', space=vmem, size = 0x9000, scoped, tag = 'internal scratch']
  #allocation2 [shape = 'f32[64,384]{1,0:T(8,128)}', space=vmem, size = 0x18000, scoped, tag = 'scratch operand']
  %s0 = inlined_call_operand.vmem [shape: f32[64,16], index: 0, kind: input, shape index: {}]
  %s1 = inlined_call_operand.vmem [shape: f32[64,16], index: 1, kind: input, shape index: {}]
  %s2 = inlined_call_operand.vmem [shape: f32[16,384], index: 2, kind: input, shape index: {}]
  %s3 = inlined_call_operand.vmem [shape: f32[16,384], index: 3, kind: input, shape index: {}]
  %s4 = inlined_call_operand.hbm [shape: f32[128,384], index: 4, kind: input, shape index: {}]
  %s5 = inlined_call_operand.vmem [shape: f32[1,384], index: 5, kind: input, shape index: {}]
  %s6 = inlined_call_operand.vmem [shape: f32[1,128], index: 6, kind: input, shape index: {}]
  %s7 = inlined_call_operand.vmem [shape: f32[8,128], index: 7, kind: input, shape index: {}]
  %s8 = inlined_call_operand.hbm [shape: f32[64,128], index: 8, kind: output, shape index: {}]
  %s9 = sld [smem:[#allocation0]]
  $region46: #{tpu_custom_call.1} parent=0
    _
  %s11 = ssub.s32 1, %s9
  %s12 = scalar_select 0, %s11, %s9
  $region1: #{tpu_custom_call.1} parent=0
    #allocation3 [shape = 'u8[196608]{0}', space=vmem, size = 0x30000, scoped, tag = 'input window, operand 4, single buffered']
    #allocation4 [shape = 's32[1]{0}', space=sflag, size = 0x4, scoped, tag = 'scoped memory for tpu_custom_call.1']
    #allocation5 [shape = 's32[1]{0}', space=sflag, size = 0x4, scoped, tag = 'scoped memory for tpu_custom_call.1']
    #allocation6 [shape = 'u8[32768]{0}', space=vmem, size = 0x8000, scoped, tag = 'output window, operand 0, single buffered']
    %13 = vsyncpa [#allocation4], 0
    %14 = vsyncpa [#allocation5], 0
    // Predicated region
    $region2: #{tpu_custom_call.1} parent=1 // pred_check
      _
    $region3: #{tpu_custom_call.1} parent=1 // pred_check_branch
      %16 = sbr.rel (0) target = $region5
    $region4: #{tpu_custom_call.1} parent=1 // pred_region
      _
    $region5: #{tpu_custom_call.1} parent=1 // pred_fallthru
      _
    // Predicated region
    $region6: #{tpu_custom_call.1} parent=1 // pred_check
      _
    $region7: #{tpu_custom_call.1} parent=1 // pred_check_branch
      %18 = sbr.rel (0) target = $region9
    $region8: #{tpu_custom_call.1} parent=1 // pred_region
      _
    $region9: #{tpu_custom_call.1} parent=1 // pred_fallthru
      _
    // Predicated region
    $region10: #{tpu_custom_call.1} parent=1 // pred_check
      _
    $region11: #{tpu_custom_call.1} parent=1 // pred_check_branch
      %20 = sbr.rel (0) target = $region13
    $region12: #{tpu_custom_call.1} parent=1 // pred_region
      _
    $region13: #{tpu_custom_call.1} parent=1 // pred_fallthru
      _
    // Predicated region
    $region14: #{tpu_custom_call.1} parent=1 // pred_check
      _
    $region15: #{tpu_custom_call.1} parent=1 // pred_check_branch
      %22 = sbr.rel (0) target = $region17
    $region16: #{tpu_custom_call.1} parent=1 // pred_region
      _
    $region17: #{tpu_custom_call.1} parent=1 // pred_fallthru
      _
    // Predicated region
    $region18: #{tpu_custom_call.1} parent=1 // pred_check
      _
    $region19: #{tpu_custom_call.1} parent=1 // pred_check_branch
      %24 = sbr.rel (0) target = $region21
    $region20: #{tpu_custom_call.1} parent=1 // pred_region
      %26 = vsyncadd [#allocation4], 0
      %s27 = sshll.u32 %s4, 4
      %s28 = int_to_ptr.hbm [resolvable:$true] %s27
      %s29 = sshll.u32 [#allocation3], 4
      %s30 = int_to_ptr.vmem [resolvable:$true] %s29
      %35 = dma.hbm_to_vmem [thread:$0]  %s28, 6144, %s30, [#allocation4], 384, 384, 24
    $region21: #{tpu_custom_call.1} parent=1 // pred_fallthru
      _
    // Predicated region
    $region22: #{tpu_custom_call.1} parent=1 // pred_check
      _
    $region23: #{tpu_custom_call.1} parent=1 // pred_check_branch
      %37 = sbr.rel (0) target = $region25
    $region24: #{tpu_custom_call.1} parent=1 // pred_region
      _
    $region25: #{tpu_custom_call.1} parent=1 // pred_fallthru
      _
    // Predicated region
    $region26: #{tpu_custom_call.1} parent=1 // pred_check
      _
    $region27: #{tpu_custom_call.1} parent=1 // pred_check_branch
      %39 = sbr.rel (0) target = $region29
    $region28: #{tpu_custom_call.1} parent=1 // pred_region
      _
    $region29: #{tpu_custom_call.1} parent=1 // pred_fallthru
      _
    // Predicated region
    $region30: #{tpu_custom_call.1} parent=1 // pred_check
      _
    $region31: #{tpu_custom_call.1} parent=1 // pred_check_branch
      %41 = sbr.rel (0) target = $region33
    $region32: #{tpu_custom_call.1} parent=1 // pred_region
      _
    $region33: #{tpu_custom_call.1} parent=1 // pred_fallthru
      _
    // Predicated region
    $region34: #{tpu_custom_call.1} parent=1 // pred_check
      _
    $region35: #{tpu_custom_call.1} parent=1 // pred_check_branch
      %43 = sbr.rel (0) target = $region37
    $region36: #{tpu_custom_call.1} parent=1 // pred_region
      %45 = dma.done [#allocation4], 6144
    $region37: #{tpu_custom_call.1} parent=1 // pred_fallthru
      _
    %v46 = vld [vmem:[%s0] sm:$0xff]
    %v47 = vld [vmem:[%s0 + $0x8] sm:$0xff]
    %v48 = vld [vmem:[%s0 + $0x10] sm:$0xff]
    %v49 = vld [vmem:[%s0 + $0x18] sm:$0xff]
    %v50 = vld [vmem:[%s0 + $0x20] sm:$0xff]
    %v51 = vld [vmem:[%s0 + $0x28] sm:$0xff]
    %v52 = vld [vmem:[%s0 + $0x30] sm:$0xff]
    %v53 = vld [vmem:[%s0 + $0x38] sm:$0xff]
    %v54 = vld [vmem:[%s2] sm:$0xff]
    %v55 = vld [vmem:[%s2 + $0x8] sm:$0xff]
    %v56 = vld [vmem:[%s2 + $0x10] sm:$0xff]
    %v57 = vld [vmem:[%s2 + $0x18] sm:$0xff]
    %v58 = vld [vmem:[%s2 + $0x20] sm:$0xff]
    %v59 = vld [vmem:[%s2 + $0x28] sm:$0xff]
    %v60 = vld [vmem:[%s1] sm:$0xff]
    %v61 = vld [vmem:[%s1 + $0x8] sm:$0xff]
    %v62 = vld [vmem:[%s1 + $0x10] sm:$0xff]
    %v63 = vld [vmem:[%s1 + $0x18] sm:$0xff]
    %v64 = vld [vmem:[%s1 + $0x20] sm:$0xff]
    %v65 = vld [vmem:[%s1 + $0x28] sm:$0xff]
    %v66 = vld [vmem:[%s1 + $0x30] sm:$0xff]
    %v67 = vld [vmem:[%s1 + $0x38] sm:$0xff]
    %v68 = vld [vmem:[%s3] sm:$0xff]
    %v69 = vld [vmem:[%s3 + $0x8] sm:$0xff]
    %v70 = vld [vmem:[%s3 + $0x10] sm:$0xff]
    %v71 = vld [vmem:[%s3 + $0x18] sm:$0xff]
    %v72 = vld [vmem:[%s3 + $0x20] sm:$0xff]
    %v73 = vld [vmem:[%s3 + $0x28] sm:$0xff]
    %vm74 = vcmask 130048
    %v76 = vsel %vm74, %v60, 0
    %v79 = vsel %vm74, %v61, 0
    %v82 = vsel %vm74, %v62, 0
    %v85 = vsel %vm74, %v63, 0
    %v88 = vsel %vm74, %v64, 0
    %v91 = vsel %vm74, %v65, 0
    %v94 = vsel %vm74, %v66, 0
    %v97 = vsel %vm74, %v67, 0
    %99 = vmatpush.msra.mxu0 0.0
    %100 = vmatpush.msra.mxu0 0.0
    %101 = vmatpush.msra.mxu0 0.0
    %102 = vmatpush.msra.mxu0 0.0
    %103 = vmatpush.msra.mxu0 0.0
    %104 = vmatpush.msra.mxu0 0.0
    %105 = vmatpush.msra.mxu0 0.0
    %106 = vmatpush.msra.mxu0 0.0
    %107 = vmatpush.msra.mxu0 0.0
    %108 = vmatpush.msra.mxu0 0.0
    %109 = vmatpush.msra.mxu0 0.0
    %110 = vmatpush.msra.mxu0 0.0
    %111 = vmatpush.msra.mxu0 0.0
    %112 = vmatpush.msra.mxu0 0.0
    %113 = vmatpush.msra.mxu0 %v71
    %114 = vmatpush.msra.mxu0 %v68
    %115 = vmatmul.f32.gmra.mxu0 %v76
    %v116 = vpop.f32.mrf.mxu0
    %v117 = vadd.f32 0.0, %v116
    %118 = vmatmul.f32.gmra.mxu0 %v79
    %v119 = vpop.f32.mrf.mxu0
    %v120 = vadd.f32 0.0, %v119
    %121 = vmatmul.f32.gmra.mxu0 %v82
    %v122 = vpop.f32.mrf.mxu0
    %v123 = vadd.f32 0.0, %v122
    %124 = vmatmul.f32.gmra.mxu0 %v85
    %v125 = vpop.f32.mrf.mxu0
    %v126 = vadd.f32 0.0, %v125
    %127 = vmatmul.f32.gmra.mxu0 %v88
    %v128 = vpop.f32.mrf.mxu0
    %v129 = vadd.f32 0.0, %v128
    %130 = vmatmul.f32.gmra.mxu0 %v91
    %v131 = vpop.f32.mrf.mxu0
    %v132 = vadd.f32 0.0, %v131
    %133 = vmatmul.f32.gmra.mxu0 %v94
    %v134 = vpop.f32.mrf.mxu0
    %v135 = vadd.f32 0.0, %v134
    %136 = vmatmul.f32.gmra.mxu0 %v97
    %v137 = vpop.f32.mrf.mxu0
    %v138 = vadd.f32 0.0, %v137
    %139 = vdwg.mxu0
    %140 = vmatpush.msra.mxu0 0.0
    %141 = vmatpush.msra.mxu0 0.0
    %142 = vmatpush.msra.mxu0 0.0
    %143 = vmatpush.msra.mxu0 0.0
    %144 = vmatpush.msra.mxu0 0.0
    %145 = vmatpush.msra.mxu0 0.0
    %146 = vmatpush.msra.mxu0 0.0
    %147 = vmatpush.msra.mxu0 0.0
    %148 = vmatpush.msra.mxu0 0.0
    %149 = vmatpush.msra.mxu0 0.0
    %150 = vmatpush.msra.mxu0 0.0
    %151 = vmatpush.msra.mxu0 0.0
    %152 = vmatpush.msra.mxu0 0.0
    %153 = vmatpush.msra.mxu0 0.0
    %154 = vmatpush.msra.mxu0 %v72
    %155 = vmatpush.msra.mxu0 %v69
    %156 = vmatmul.f32.gmra.mxu0 %v76
    %v157 = vpop.f32.mrf.mxu0
    %v158 = vadd.f32 0.0, %v157
    %159 = vmatmul.f32.gmra.mxu0 %v79
    %v160 = vpop.f32.mrf.mxu0
    %v161 = vadd.f32 0.0, %v160
    %162 = vmatmul.f32.gmra.mxu0 %v82
    %v163 = vpop.f32.mrf.mxu0
    %v164 = vadd.f32 0.0, %v163
    %165 = vmatmul.f32.gmra.mxu0 %v85
    %v166 = vpop.f32.mrf.mxu0
    %v167 = vadd.f32 0.0, %v166
    %168 = vmatmul.f32.gmra.mxu0 %v88
    %v169 = vpop.f32.mrf.mxu0
    %v170 = vadd.f32 0.0, %v169
    %171 = vmatmul.f32.gmra.mxu0 %v91
    %v172 = vpop.f32.mrf.mxu0
    %v173 = vadd.f32 0.0, %v172
    %174 = vmatmul.f32.gmra.mxu0 %v94
    %v175 = vpop.f32.mrf.mxu0
    %v176 = vadd.f32 0.0, %v175
    %177 = vmatmul.f32.gmra.mxu0 %v97
    %v178 = vpop.f32.mrf.mxu0
    %v179 = vadd.f32 0.0, %v178
    %180 = vdwg.mxu0
    %181 = vmatpush.msra.mxu0 0.0
    %182 = vmatpush.msra.mxu0 0.0
    %183 = vmatpush.msra.mxu0 0.0
    %184 = vmatpush.msra.mxu0 0.0
    %185 = vmatpush.msra.mxu0 0.0
    %186 = vmatpush.msra.mxu0 0.0
    %187 = vmatpush.msra.mxu0 0.0
    %188 = vmatpush.msra.mxu0 0.0
    %189 = vmatpush.msra.mxu0 0.0
    %190 = vmatpush.msra.mxu0 0.0
    %191 = vmatpush.msra.mxu0 0.0
    %192 = vmatpush.msra.mxu0 0.0
    %193 = vmatpush.msra.mxu0 0.0
    %194 = vmatpush.msra.mxu0 0.0
    %195 = vmatpush.msra.mxu0 %v73
    %196 = vmatpush.msra.mxu0 %v70
    %197 = vmatmul.f32.gmra.mxu0 %v76
    %v198 = vpop.f32.mrf.mxu0
    %v199 = vadd.f32 0.0, %v198
    %200 = vmatmul.f32.gmra.mxu0 %v79
    %v201 = vpop.f32.mrf.mxu0
    %v202 = vadd.f32 0.0, %v201
    %203 = vmatmul.f32.gmra.mxu0 %v82
    %v204 = vpop.f32.mrf.mxu0
    %v205 = vadd.f32 0.0, %v204
    %206 = vmatmul.f32.gmra.mxu0 %v85
    %v207 = vpop.f32.mrf.mxu0
    %v208 = vadd.f32 0.0, %v207
    %209 = vmatmul.f32.gmra.mxu0 %v88
    %v210 = vpop.f32.mrf.mxu0
    %v211 = vadd.f32 0.0, %v210
    %212 = vmatmul.f32.gmra.mxu0 %v91
    %v213 = vpop.f32.mrf.mxu0
    %v214 = vadd.f32 0.0, %v213
    %215 = vmatmul.f32.gmra.mxu0 %v94
    %v216 = vpop.f32.mrf.mxu0
    %v217 = vadd.f32 0.0, %v216
    %218 = vmatmul.f32.gmra.mxu0 %v97
    %v219 = vpop.f32.mrf.mxu0
    %v220 = vadd.f32 0.0, %v219
    %221 = vdwg.mxu0
    %v223 = vsel %vm74, %v46, 0
    %v226 = vsel %vm74, %v47, 0
    %v229 = vsel %vm74, %v48, 0
    %v232 = vsel %vm74, %v49, 0
    %v235 = vsel %vm74, %v50, 0
    %v238 = vsel %vm74, %v51, 0
    %v241 = vsel %vm74, %v52, 0
    %v244 = vsel %vm74, %v53, 0
    %246 = vmatpush.msra.mxu0 0.0
    %247 = vmatpush.msra.mxu0 0.0
    %248 = vmatpush.msra.mxu0 0.0
    %249 = vmatpush.msra.mxu0 0.0
    %250 = vmatpush.msra.mxu0 0.0
    %251 = vmatpush.msra.mxu0 0.0
    %252 = vmatpush.msra.mxu0 0.0
    %253 = vmatpush.msra.mxu0 0.0
    %254 = vmatpush.msra.mxu0 0.0
    %255 = vmatpush.msra.mxu0 0.0
    %256 = vmatpush.msra.mxu0 0.0
    %257 = vmatpush.msra.mxu0 0.0
    %258 = vmatpush.msra.mxu0 0.0
    %259 = vmatpush.msra.mxu0 0.0
    %260 = vmatpush.msra.mxu0 %v57
    %261 = vmatpush.msra.mxu0 %v54
    %262 = vmatmul.f32.gmra.mxu0 %v223
    %v263 = vpop.f32.mrf.mxu0
    %v264 = vadd.f32 %v117, %v263
    %265 = vmatmul.f32.gmra.mxu0 %v226
    %v266 = vpop.f32.mrf.mxu0
    %v267 = vadd.f32 %v120, %v266
    %268 = vmatmul.f32.gmra.mxu0 %v229
    %v269 = vpop.f32.mrf.mxu0
    %v270 = vadd.f32 %v123, %v269
    %271 = vmatmul.f32.gmra.mxu0 %v232
    %v272 = vpop.f32.mrf.mxu0
    %v273 = vadd.f32 %v126, %v272
    %274 = vmatmul.f32.gmra.mxu0 %v235
    %v275 = vpop.f32.mrf.mxu0
    %v276 = vadd.f32 %v129, %v275
    %277 = vmatmul.f32.gmra.mxu0 %v238
    %v278 = vpop.f32.mrf.mxu0
    %v279 = vadd.f32 %v132, %v278
    %280 = vmatmul.f32.gmra.mxu0 %v241
    %v281 = vpop.f32.mrf.mxu0
    %v282 = vadd.f32 %v135, %v281
    %283 = vmatmul.f32.gmra.mxu0 %v244
    %v284 = vpop.f32.mrf.mxu0
    %v285 = vadd.f32 %v138, %v284
    %286 = vdwg.mxu0
    %287 = vmatpush.msra.mxu0 0.0
    %288 = vmatpush.msra.mxu0 0.0
    %289 = vmatpush.msra.mxu0 0.0
    %290 = vmatpush.msra.mxu0 0.0
    %291 = vmatpush.msra.mxu0 0.0
    %292 = vmatpush.msra.mxu0 0.0
    %293 = vmatpush.msra.mxu0 0.0
    %294 = vmatpush.msra.mxu0 0.0
    %295 = vmatpush.msra.mxu0 0.0
    %296 = vmatpush.msra.mxu0 0.0
    %297 = vmatpush.msra.mxu0 0.0
    %298 = vmatpush.msra.mxu0 0.0
    %299 = vmatpush.msra.mxu0 0.0
    %300 = vmatpush.msra.mxu0 0.0
    %301 = vmatpush.msra.mxu0 %v58
    %302 = vmatpush.msra.mxu0 %v55
    %303 = vmatmul.f32.gmra.mxu0 %v223
    %v304 = vpop.f32.mrf.mxu0
    %v305 = vadd.f32 %v158, %v304
    %306 = vmatmul.f32.gmra.mxu0 %v226
    %v307 = vpop.f32.mrf.mxu0
    %v308 = vadd.f32 %v161, %v307
    %309 = vmatmul.f32.gmra.mxu0 %v229
    %v310 = vpop.f32.mrf.mxu0
    %v311 = vadd.f32 %v164, %v310
    %312 = vmatmul.f32.gmra.mxu0 %v232
    %v313 = vpop.f32.mrf.mxu0
    %v314 = vadd.f32 %v167, %v313
    %315 = vmatmul.f32.gmra.mxu0 %v235
    %v316 = vpop.f32.mrf.mxu0
    %v317 = vadd.f32 %v170, %v316
    %318 = vmatmul.f32.gmra.mxu0 %v238
    %v319 = vpop.f32.mrf.mxu0
    %v320 = vadd.f32 %v173, %v319
    %321 = vmatmul.f32.gmra.mxu0 %v241
    %v322 = vpop.f32.mrf.mxu0
    %v323 = vadd.f32 %v176, %v322
    %324 = vmatmul.f32.gmra.mxu0 %v244
    %v325 = vpop.f32.mrf.mxu0
    %v326 = vadd.f32 %v179, %v325
    %327 = vdwg.mxu0
    %328 = vmatpush.msra.mxu0 0.0
    %329 = vmatpush.msra.mxu0 0.0
    %330 = vmatpush.msra.mxu0 0.0
    %331 = vmatpush.msra.mxu0 0.0
    %332 = vmatpush.msra.mxu0 0.0
    %333 = vmatpush.msra.mxu0 0.0
    %334 = vmatpush.msra.mxu0 0.0
    %335 = vmatpush.msra.mxu0 0.0
    %336 = vmatpush.msra.mxu0 0.0
    %337 = vmatpush.msra.mxu0 0.0
    %338 = vmatpush.msra.mxu0 0.0
    %339 = vmatpush.msra.mxu0 0.0
    %340 = vmatpush.msra.mxu0 0.0
    %341 = vmatpush.msra.mxu0 0.0
    %342 = vmatpush.msra.mxu0 %v59
    %343 = vmatpush.msra.mxu0 %v56
    %344 = vmatmul.f32.gmra.mxu0 %v223
    %v345 = vpop.f32.mrf.mxu0
    %v346 = vadd.f32 %v199, %v345
    %347 = vmatmul.f32.gmra.mxu0 %v226
    %v348 = vpop.f32.mrf.mxu0
    %v349 = vadd.f32 %v202, %v348
    %350 = vmatmul.f32.gmra.mxu0 %v229
    %v351 = vpop.f32.mrf.mxu0
    %v352 = vadd.f32 %v205, %v351
    %353 = vmatmul.f32.gmra.mxu0 %v232
    %v354 = vpop.f32.mrf.mxu0
    %v355 = vadd.f32 %v208, %v354
    %356 = vmatmul.f32.gmra.mxu0 %v235
    %v357 = vpop.f32.mrf.mxu0
    %v358 = vadd.f32 %v211, %v357
    %359 = vmatmul.f32.gmra.mxu0 %v238
    %v360 = vpop.f32.mrf.mxu0
    %v361 = vadd.f32 %v214, %v360
    %362 = vmatmul.f32.gmra.mxu0 %v241
    %v363 = vpop.f32.mrf.mxu0
    %v364 = vadd.f32 %v217, %v363
    %365 = vmatmul.f32.gmra.mxu0 %v244
    %v366 = vpop.f32.mrf.mxu0
    %v367 = vadd.f32 %v220, %v366
    %368 = vdwg.mxu0
    %v369 = vld [vmem:[%s5] sm:$0x7]
    %v371 = vperm.slane %v369, 0
    %v372 = vperm.slane %v369, 1
    %v373 = vperm.slane %v369, 2
    %v377 = vadd.f32 %v264, %v371
    %v378 = vadd.f32 %v305, %v372
    %v379 = vadd.f32 %v346, %v373
    %v380 = vadd.f32 %v267, %v371
    %v381 = vadd.f32 %v308, %v372
    %v382 = vadd.f32 %v349, %v373
    %v383 = vadd.f32 %v270, %v371
    %v384 = vadd.f32 %v311, %v372
    %v385 = vadd.f32 %v352, %v373
    %v386 = vadd.f32 %v273, %v371
    %v387 = vadd.f32 %v314, %v372
    %v388 = vadd.f32 %v355, %v373
    %v389 = vadd.f32 %v276, %v371
    %v390 = vadd.f32 %v317, %v372
    %v391 = vadd.f32 %v358, %v373
    %v392 = vadd.f32 %v279, %v371
    %v393 = vadd.f32 %v320, %v372
    %v394 = vadd.f32 %v361, %v373
    %v395 = vadd.f32 %v282, %v371
    %v396 = vadd.f32 %v323, %v372
    %v397 = vadd.f32 %v364, %v373
    %v398 = vadd.f32 %v285, %v371
    %v399 = vadd.f32 %v326, %v372
    %v400 = vadd.f32 %v367, %v373
    %401 = vst [vmem:[#allocation2] sm:$0xff] %v377
    %402 = vst [vmem:[#allocation2 + $0x8] sm:$0xff] %v378
    %403 = vst [vmem:[#allocation2 + $0x10] sm:$0xff] %v379
    %404 = vst [vmem:[#allocation2 + $0x18] sm:$0xff] %v380
    %405 = vst [vmem:[#allocation2 + $0x20] sm:$0xff] %v381
    %406 = vst [vmem:[#allocation2 + $0x28] sm:$0xff] %v382
    %407 = vst [vmem:[#allocation2 + $0x30] sm:$0xff] %v383
    %408 = vst [vmem:[#allocation2 + $0x38] sm:$0xff] %v384
    %409 = vst [vmem:[#allocation2 + $0x40] sm:$0xff] %v385
    %410 = vst [vmem:[#allocation2 + $0x48] sm:$0xff] %v386
    %411 = vst [vmem:[#allocation2 + $0x50] sm:$0xff] %v387
    %412 = vst [vmem:[#allocation2 + $0x58] sm:$0xff] %v388
    %413 = vst [vmem:[#allocation2 + $0x60] sm:$0xff] %v389
    %414 = vst [vmem:[#allocation2 + $0x68] sm:$0xff] %v390
    %415 = vst [vmem:[#allocation2 + $0x70] sm:$0xff] %v391
    %416 = vst [vmem:[#allocation2 + $0x78] sm:$0xff] %v392
    %417 = vst [vmem:[#allocation2 + $0x80] sm:$0xff] %v393
    %418 = vst [vmem:[#allocation2 + $0x88] sm:$0xff] %v394
    %419 = vst [vmem:[#allocation2 + $0x90] sm:$0xff] %v395
    %420 = vst [vmem:[#allocation2 + $0x98] sm:$0xff] %v396
    %421 = vst [vmem:[#allocation2 + $0xa0] sm:$0xff] %v397
    %422 = vst [vmem:[#allocation2 + $0xa8] sm:$0xff] %v398
    %423 = vst [vmem:[#allocation2 + $0xb0] sm:$0xff] %v399
    %424 = vst [vmem:[#allocation2 + $0xb8] sm:$0xff] %v400
    %v425 = vld [vmem:[%s6] sm:$0x1]
    %v427 = vperm.slane %v425, 0
    %v429 = vld [vmem:[%s7] sm:$0xff]
    %s430 = smul.u32 0, 3
    %s431 = smul.addr %s430, 8
    %s432 = scalar_lea.vmem [#allocation2], %s431
    %v433 = vld [vmem:[%s432] sm:$0xff]
    %v434 = vld [vmem:[%s432 + $0x8] sm:$0xff]
    %v435 = vld [vmem:[%s432 + $0x10] sm:$0xff]
    %v436 = vld [vmem:[#allocation3] sm:$0xff]
    %v437 = vld [vmem:[#allocation3 + $0x8] sm:$0xff]
    %v438 = vld [vmem:[#allocation3 + $0x10] sm:$0xff]
    %v439 = vld [vmem:[#allocation3 + $0x18] sm:$0xff]
    %v440 = vld [vmem:[#allocation3 + $0x20] sm:$0xff]
    %v441 = vld [vmem:[#allocation3 + $0x28] sm:$0xff]
    %v442 = vld [vmem:[#allocation3 + $0x30] sm:$0xff]
    %v443 = vld [vmem:[#allocation3 + $0x38] sm:$0xff]
    %v444 = vld [vmem:[#allocation3 + $0x40] sm:$0xff]
    %v445 = vld [vmem:[#allocation3 + $0x48] sm:$0xff]
    %v446 = vld [vmem:[#allocation3 + $0x50] sm:$0xff]
    %v447 = vld [vmem:[#allocation3 + $0x58] sm:$0xff]
    %v448 = vld [vmem:[#allocation3 + $0x60] sm:$0xff]
    %v449 = vld [vmem:[#allocation3 + $0x68] sm:$0xff]
    %v450 = vld [vmem:[#allocation3 + $0x70] sm:$0xff]
    %v451 = vld [vmem:[#allocation3 + $0x78] sm:$0xff]
    %v452 = vld [vmem:[#allocation3 + $0x80] sm:$0xff]
    %v453 = vld [vmem:[#allocation3 + $0x88] sm:$0xff]
    %v454 = vld [vmem:[#allocation3 + $0x90] sm:$0xff]
    %v455 = vld [vmem:[#allocation3 + $0x98] sm:$0xff]
    %v456 = vld [vmem:[#allocation3 + $0xa0] sm:$0xff]
    %v457 = vld [vmem:[#allocation3 + $0xa8] sm:$0xff]
    %v458 = vld [vmem:[#allocation3 + $0xb0] sm:$0xff]
    %v459 = vld [vmem:[#allocation3 + $0xb8] sm:$0xff]
    %v460 = vld [vmem:[#allocation3 + $0xc0] sm:$0xff]
    %v461 = vld [vmem:[#allocation3 + $0xc8] sm:$0xff]
    %v462 = vld [vmem:[#allocation3 + $0xd0] sm:$0xff]
    %v463 = vld [vmem:[#allocation3 + $0xd8] sm:$0xff]
    %v464 = vld [vmem:[#allocation3 + $0xe0] sm:$0xff]
    %v465 = vld [vmem:[#allocation3 + $0xe8] sm:$0xff]
    %v466 = vld [vmem:[#allocation3 + $0xf0] sm:$0xff]
    %v467 = vld [vmem:[#allocation3 + $0xf8] sm:$0xff]
    %v468 = vld [vmem:[#allocation3 + $0x100] sm:$0xff]
    %v469 = vld [vmem:[#allocation3 + $0x108] sm:$0xff]
    %v470 = vld [vmem:[#allocation3 + $0x110] sm:$0xff]
    %v471 = vld [vmem:[#allocation3 + $0x118] sm:$0xff]
    %v472 = vld [vmem:[#allocation3 + $0x120] sm:$0xff]
    %v473 = vld [vmem:[#allocation3 + $0x128] sm:$0xff]
    %v474 = vld [vmem:[#allocation3 + $0x130] sm:$0xff]
    %v475 = vld [vmem:[#allocation3 + $0x138] sm:$0xff]
    %v476 = vld [vmem:[#allocation3 + $0x140] sm:$0xff]
    %v477 = vld [vmem:[#allocation3 + $0x148] sm:$0xff]
    %v478 = vld [vmem:[#allocation3 + $0x150] sm:$0xff]
    %v479 = vld [vmem:[#allocation3 + $0x158] sm:$0xff]
    %v480 = vld [vmem:[#allocation3 + $0x160] sm:$0xff]
    %v481 = vld [vmem:[#allocation3 + $0x168] sm:$0xff]
    %v482 = vld [vmem:[#allocation3 + $0x170] sm:$0xff]
    %v483 = vld [vmem:[#allocation3 + $0x178] sm:$0xff]
    %484 = vmatpush.msra.mxu0 %v481
    %485 = vmatpush.msra.mxu0 %v478
    %486 = vmatpush.msra.mxu0 %v475
    %487 = vmatpush.msra.mxu0 %v472
    %488 = vmatpush.msra.mxu0 %v469
    %489 = vmatpush.msra.mxu0 %v466
    %490 = vmatpush.msra.mxu0 %v463
    %491 = vmatpush.msra.mxu0 %v460
    %492 = vmatpush.msra.mxu0 %v457
    %493 = vmatpush.msra.mxu0 %v454
    %494 = vmatpush.msra.mxu0 %v451
    %495 = vmatpush.msra.mxu0 %v448
    %496 = vmatpush.msra.mxu0 %v445
    %497 = vmatpush.msra.mxu0 %v442
    %498 = vmatpush.msra.mxu0 %v439
    %499 = vmatpush.msra.mxu0 %v436
    %500 = vmatmul.f32.gmra.mxu0 %v429
    %v501 = vpop.f32.mrf.mxu0
    %v502 = vadd.f32 0.0, %v501
    %503 = vdwg.mxu0
    %504 = vmatpush.msra.mxu0 %v482
    %505 = vmatpush.msra.mxu0 %v479
    %506 = vmatpush.msra.mxu0 %v476
    %507 = vmatpush.msra.mxu0 %v473
    %508 = vmatpush.msra.mxu0 %v470
    %509 = vmatpush.msra.mxu0 %v467
    %510 = vmatpush.msra.mxu0 %v464
    %511 = vmatpush.msra.mxu0 %v461
    %512 = vmatpush.msra.mxu0 %v458
    %513 = vmatpush.msra.mxu0 %v455
    %514 = vmatpush.msra.mxu0 %v452
    %515 = vmatpush.msra.mxu0 %v449
    %516 = vmatpush.msra.mxu0 %v446
    %517 = vmatpush.msra.mxu0 %v443
    %518 = vmatpush.msra.mxu0 %v440
    %519 = vmatpush.msra.mxu0 %v437
    %520 = vmatmul.f32.gmra.mxu0 %v429
    %v521 = vpop.f32.mrf.mxu0
    %v522 = vadd.f32 0.0, %v521
    %523 = vdwg.mxu0
    %524 = vmatpush.msra.mxu0 %v483
    %525 = vmatpush.msra.mxu0 %v480
    %526 = vmatpush.msra.mxu0 %v477
    %527 = vmatpush.msra.mxu0 %v474
    %528 = vmatpush.msra.mxu0 %v471
    %529 = vmatpush.msra.mxu0 %v468
    %530 = vmatpush.msra.mxu0 %v465
    %531 = vmatpush.msra.mxu0 %v462
    %532 = vmatpush.msra.mxu0 %v459
    %533 = vmatpush.msra.mxu0 %v456
    %534 = vmatpush.msra.mxu0 %v453
    %535 = vmatpush.msra.mxu0 %v450
    %536 = vmatpush.msra.mxu0 %v447
    %537 = vmatpush.msra.mxu0 %v444
    %538 = vmatpush.msra.mxu0 %v441
    %539 = vmatpush.msra.mxu0 %v438
    %540 = vmatmul.f32.gmra.mxu0 %v429
    %v541 = vpop.f32.mrf.mxu0
    %v542 = vadd.f32 0.0, %v541
    %543 = vdwg.mxu0
    %v544 = vadd.f32 %v433, %v502
    %v545 = vadd.f32 %v434, %v522
    %v546 = vxor.u32 %v544, 2147483648
    %v547 = vxor.u32 %v545, 2147483648
    %v548 = vmul.f32 %v546, 1.442695
    %v549 = vpow.pop %v548
    %v550 = vmul.f32 %v547, 1.442695
    %v551 = vpow.pop %v550
    %v552 = vadd.f32 %v549, 1.0
    %v553 = vadd.f32 %v551, 1.0
    %v554 = vrcp.pop %v552
    %v555 = vmul.f32 %v552, %v554
    %v556 = vsub.f32 1.0, %v555
    %v557 = vmul.f32 %v554, %v556
    %v558 = vadd.f32 %v554, %v557
    %vm559 = vweird.f32 %v552
    %vm560 = vweird.f32 %v554
    %vm561 = vmor %vm559, %vm560
    %v562 = vsel %vm561, %v554, %v558
    %v563 = vand.u32 2147483647, %v552
    %vm564 = vcmp.eq.f32.partialorder %v563, 8.507059e+37
    %v565 = vand.u32 %v552, 2147483648
    %v566 = vor.u32 1.1754944e-38, %v565
    %v567 = vsel %vm564, %v566, %v562
    %v568 = vmul.f32 1.0, %v567
    %v569 = vrcp.pop %v553
    %v570 = vmul.f32 %v553, %v569
    %v571 = vsub.f32 1.0, %v570
    %v572 = vmul.f32 %v569, %v571
    %v573 = vadd.f32 %v569, %v572
    %vm574 = vweird.f32 %v553
    %vm575 = vweird.f32 %v569
    %vm576 = vmor %vm574, %vm575
    %v577 = vsel %vm576, %v569, %v573
    %v578 = vand.u32 2147483647, %v553
    %vm579 = vcmp.eq.f32.partialorder %v578, 8.507059e+37
    %v580 = vand.u32 %v553, 2147483648
    %v581 = vor.u32 1.1754944e-38, %v580
    %v582 = vsel %vm579, %v581, %v577
    %v583 = vmul.f32 1.0, %v582
    %v584 = vadd.f32 %v542, %v427
    %v585 = vmul.f32 %v568, %v584
    %v586 = vadd.f32 %v435, %v585
    %v587 = vtanh.pop %v586
    %v588 = vsub.f32 1.0, %v583
    %v589 = vmul.f32 %v588, %v587
    %v590 = vmul.f32 %v583, %v429
    %v591 = vadd.f32 %v589, %v590
    %v592 = vtanh.pop %v591
    %593 = vst [vmem:[#allocation6] sm:$0xff] %v592
    %s594 = smul.u32 1, 3
    %s595 = smul.addr %s594, 8
    %s596 = scalar_lea.vmem [#allocation2], %s595
    %v597 = vld [vmem:[%s596] sm:$0xff]
    %v598 = vld [vmem:[%s596 + $0x8] sm:$0xff]
    %v599 = vld [vmem:[%s596 + $0x10] sm:$0xff]
    %v600 = vld [vmem:[#allocation3] sm:$0xff]
    %v601 = vld [vmem:[#allocation3 + $0x8] sm:$0xff]
    %v602 = vld [vmem:[#allocation3 + $0x10] sm:$0xff]
    %v603 = vld [vmem:[#allocation3 + $0x18] sm:$0xff]
    %v604 = vld [vmem:[#allocation3 + $0x20] sm:$0xff]
    %v605 = vld [vmem:[#allocation3 + $0x28] sm:$0xff]
    %v606 = vld [vmem:[#allocation3 + $0x30] sm:$0xff]
    %v607 = vld [vmem:[#allocation3 + $0x38] sm:$0xff]
    %v608 = vld [vmem:[#allocation3 + $0x40] sm:$0xff]
    %v609 = vld [vmem:[#allocation3 + $0x48] sm:$0xff]
    %v610 = vld [vmem:[#allocation3 + $0x50] sm:$0xff]
    %v611 = vld [vmem:[#allocation3 + $0x58] sm:$0xff]
    %v612 = vld [vmem:[#allocation3 + $0x60] sm:$0xff]
    %v613 = vld [vmem:[#allocation3 + $0x68] sm:$0xff]
    %v614 = vld [vmem:[#allocation3 + $0x70] sm:$0xff]
    %v615 = vld [vmem:[#allocation3 + $0x78] sm:$0xff]
    %v616 = vld [vmem:[#allocation3 + $0x80] sm:$0xff]
    %v617 = vld [vmem:[#allocation3 + $0x88] sm:$0xff]
    %v618 = vld [vmem:[#allocation3 + $0x90] sm:$0xff]
    %v619 = vld [vmem:[#allocation3 + $0x98] sm:$0xff]
    %v620 = vld [vmem:[#allocation3 + $0xa0] sm:$0xff]
    %v621 = vld [vmem:[#allocation3 + $0xa8] sm:$0xff]
    %v622 = vld [vmem:[#allocation3 + $0xb0] sm:$0xff]
    %v623 = vld [vmem:[#allocation3 + $0xb8] sm:$0xff]
    %v624 = vld [vmem:[#allocation3 + $0xc0] sm:$0xff]
    %v625 = vld [vmem:[#allocation3 + $0xc8] sm:$0xff]
    %v626 = vld [vmem:[#allocation3 + $0xd0] sm:$0xff]
    %v627 = vld [vmem:[#allocation3 + $0xd8] sm:$0xff]
    %v628 = vld [vmem:[#allocation3 + $0xe0] sm:$0xff]
    %v629 = vld [vmem:[#allocation3 + $0xe8] sm:$0xff]
    %v630 = vld [vmem:[#allocation3 + $0xf0] sm:$0xff]
    %v631 = vld [vmem:[#allocation3 + $0xf8] sm:$0xff]
    %v632 = vld [vmem:[#allocation3 + $0x100] sm:$0xff]
    %v633 = vld [vmem:[#allocation3 + $0x108] sm:$0xff]
    %v634 = vld [vmem:[#allocation3 + $0x110] sm:$0xff]
    %v635 = vld [vmem:[#allocation3 + $0x118] sm:$0xff]
    %v636 = vld [vmem:[#allocation3 + $0x120] sm:$0xff]
    %v637 = vld [vmem:[#allocation3 + $0x128] sm:$0xff]
    %v638 = vld [vmem:[#allocation3 + $0x130] sm:$0xff]
    %v639 = vld [vmem:[#allocation3 + $0x138] sm:$0xff]
    %v640 = vld [vmem:[#allocation3 + $0x140] sm:$0xff]
    %v641 = vld [vmem:[#allocation3 + $0x148] sm:$0xff]
    %v642 = vld [vmem:[#allocation3 + $0x150] sm:$0xff]
    %v643 = vld [vmem:[#allocation3 + $0x158] sm:$0xff]
    %v644 = vld [vmem:[#allocation3 + $0x160] sm:$0xff]
    %v645 = vld [vmem:[#allocation3 + $0x168] sm:$0xff]
    %v646 = vld [vmem:[#allocation3 + $0x170] sm:$0xff]
    %v647 = vld [vmem:[#allocation3 + $0x178] sm:$0xff]
    %648 = vmatpush.msra.mxu0 %v645
    %649 = vmatpush.msra.mxu0 %v642
    %650 = vmatpush.msra.mxu0 %v639
    %651 = vmatpush.msra.mxu0 %v636
    %652 = vmatpush.msra.mxu0 %v633
    %653 = vmatpush.msra.mxu0 %v630
    %654 = vmatpush.msra.mxu0 %v627
    %655 = vmatpush.msra.mxu0 %v624
    %656 = vmatpush.msra.mxu0 %v621
    %657 = vmatpush.msra.mxu0 %v618
    %658 = vmatpush.msra.mxu0 %v615
    %659 = vmatpush.msra.mxu0 %v612
    %660 = vmatpush.msra.mxu0 %v609
    %661 = vmatpush.msra.mxu0 %v606
    %662 = vmatpush.msra.mxu0 %v603
    %663 = vmatpush.msra.mxu0 %v600
    %664 = vmatmul.f32.gmra.mxu0 %v592
    %v665 = vpop.f32.mrf.mxu0
    %v666 = vadd.f32 0.0, %v665
    %667 = vdwg.mxu0
    %668 = vmatpush.msra.mxu0 %v646
    %669 = vmatpush.msra.mxu0 %v643
    %670 = vmatpush.msra.mxu0 %v640
    %671 = vmatpush.msra.mxu0 %v637
    %672 = vmatpush.msra.mxu0 %v634
    %673 = vmatpush.msra.mxu0 %v631
    %674 = vmatpush.msra.mxu0 %v628
    %675 = vmatpush.msra.mxu0 %v625
    %676 = vmatpush.msra.mxu0 %v622
    %677 = vmatpush.msra.mxu0 %v619
    %678 = vmatpush.msra.mxu0 %v616
    %679 = vmatpush.msra.mxu0 %v613
    %680 = vmatpush.msra.mxu0 %v610
    %681 = vmatpush.msra.mxu0 %v607
    %682 = vmatpush.msra.mxu0 %v604
    %683 = vmatpush.msra.mxu0 %v601
    %684 = vmatmul.f32.gmra.mxu0 %v592
    %v685 = vpop.f32.mrf.mxu0
    %v686 = vadd.f32 0.0, %v685
    %687 = vdwg.mxu0
    %688 = vmatpush.msra.mxu0 %v647
    %689 = vmatpush.msra.mxu0 %v644
    %690 = vmatpush.msra.mxu0 %v641
    %691 = vmatpush.msra.mxu0 %v638
    %692 = vmatpush.msra.mxu0 %v635
    %693 = vmatpush.msra.mxu0 %v632
    %694 = vmatpush.msra.mxu0 %v629
    %695 = vmatpush.msra.mxu0 %v626
    %696 = vmatpush.msra.mxu0 %v623
    %697 = vmatpush.msra.mxu0 %v620
    %698 = vmatpush.msra.mxu0 %v617
    %699 = vmatpush.msra.mxu0 %v614
    %700 = vmatpush.msra.mxu0 %v611
    %701 = vmatpush.msra.mxu0 %v608
    %702 = vmatpush.msra.mxu0 %v605
    %703 = vmatpush.msra.mxu0 %v602
    %704 = vmatmul.f32.gmra.mxu0 %v592
    %v705 = vpop.f32.mrf.mxu0
    %v706 = vadd.f32 0.0, %v705
    %707 = vdwg.mxu0
    %v708 = vadd.f32 %v597, %v666
    %v709 = vadd.f32 %v598, %v686
    %v710 = vxor.u32 %v708, 2147483648
    %v711 = vxor.u32 %v709, 2147483648
    %v712 = vmul.f32 %v710, 1.442695
    %v713 = vpow.pop %v712
    %v714 = vmul.f32 %v711, 1.442695
    %v715 = vpow.pop %v714
    %v716 = vadd.f32 %v713, 1.0
    %v717 = vadd.f32 %v715, 1.0
    %v718 = vrcp.pop %v716
    %v719 = vmul.f32 %v716, %v718
    %v720 = vsub.f32 1.0, %v719
    %v721 = vmul.f32 %v718, %v720
    %v722 = vadd.f32 %v718, %v721
    %vm723 = vweird.f32 %v716
    %vm724 = vweird.f32 %v718
    %vm725 = vmor %vm723, %vm724
    %v726 = vsel %vm725, %v718, %v722
    %v727 = vand.u32 2147483647, %v716
    %vm728 = vcmp.eq.f32.partialorder %v727, 8.507059e+37
    %v729 = vand.u32 %v716, 2147483648
    %v730 = vor.u32 1.1754944e-38, %v729
    %v731 = vsel %vm728, %v730, %v726
    %v732 = vmul.f32 1.0, %v731
    %v733 = vrcp.pop %v717
    %v734 = vmul.f32 %v717, %v733
    %v735 = vsub.f32 1.0, %v734
    %v736 = vmul.f32 %v733, %v735
    %v737 = vadd.f32 %v733, %v736
    %vm738 = vweird.f32 %v717
    %vm739 = vweird.f32 %v733
    %vm740 = vmor %vm738, %vm739
    %v741 = vsel %vm740, %v733, %v737
    %v742 = vand.u32 2147483647, %v717
    %vm743 = vcmp.eq.f32.partialorder %v742, 8.507059e+37
    %v744 = vand.u32 %v717, 2147483648
    %v745 = vor.u32 1.1754944e-38, %v744
    %v746 = vsel %vm743, %v745, %v741
    %v747 = vmul.f32 1.0, %v746
    %v748 = vadd.f32 %v706, %v427
    %v749 = vmul.f32 %v732, %v748
    %v750 = vadd.f32 %v599, %v749
    %v751 = vtanh.pop %v750
    %v752 = vsub.f32 1.0, %v747
    %v753 = vmul.f32 %v752, %v751
    %v754 = vmul.f32 %v747, %v592
    %v755 = vadd.f32 %v753, %v754
    %v756 = vtanh.pop %v755
    %s757 = scalar_lea.vmem [#allocation6], 8
    %758 = vst [vmem:[%s757] sm:$0xff] %v756
    %s759 = smul.u32 2, 3
    %s760 = smul.addr %s759, 8
    %s761 = scalar_lea.vmem [#allocation2], %s760
    %v762 = vld [vmem:[%s761] sm:$0xff]
    %v763 = vld [vmem:[%s761 + $0x8] sm:$0xff]
    %v764 = vld [vmem:[%s761 + $0x10] sm:$0xff]
    %v765 = vld [vmem:[#allocation3] sm:$0xff]
    %v766 = vld [vmem:[#allocation3 + $0x8] sm:$0xff]
    %v767 = vld [vmem:[#allocation3 + $0x10] sm:$0xff]
    %v768 = vld [vmem:[#allocation3 + $0x18] sm:$0xff]
    %v769 = vld [vmem:[#allocation3 + $0x20] sm:$0xff]
    %v770 = vld [vmem:[#allocation3 + $0x28] sm:$0xff]
    %v771 = vld [vmem:[#allocation3 + $0x30] sm:$0xff]
    %v772 = vld [vmem:[#allocation3 + $0x38] sm:$0xff]
    %v773 = vld [vmem:[#allocation3 + $0x40] sm:$0xff]
    %v774 = vld [vmem:[#allocation3 + $0x48] sm:$0xff]
    %v775 = vld [vmem:[#allocation3 + $0x50] sm:$0xff]
    %v776 = vld [vmem:[#allocation3 + $0x58] sm:$0xff]
    %v777 = vld [vmem:[#allocation3 + $0x60] sm:$0xff]
    %v778 = vld [vmem:[#allocation3 + $0x68] sm:$0xff]
    %v779 = vld [vmem:[#allocation3 + $0x70] sm:$0xff]
    %v780 = vld [vmem:[#allocation3 + $0x78] sm:$0xff]
    %v781 = vld [vmem:[#allocation3 + $0x80] sm:$0xff]
    %v782 = vld [vmem:[#allocation3 + $0x88] sm:$0xff]
    %v783 = vld [vmem:[#allocation3 + $0x90] sm:$0xff]
    %v784 = vld [vmem:[#allocation3 + $0x98] sm:$0xff]
    %v785 = vld [vmem:[#allocation3 + $0xa0] sm:$0xff]
    %v786 = vld [vmem:[#allocation3 + $0xa8] sm:$0xff]
    %v787 = vld [vmem:[#allocation3 + $0xb0] sm:$0xff]
    %v788 = vld [vmem:[#allocation3 + $0xb8] sm:$0xff]
    %v789 = vld [vmem:[#allocation3 + $0xc0] sm:$0xff]
    %v790 = vld [vmem:[#allocation3 + $0xc8] sm:$0xff]
    %v791 = vld [vmem:[#allocation3 + $0xd0] sm:$0xff]
    %v792 = vld [vmem:[#allocation3 + $0xd8] sm:$0xff]
    %v793 = vld [vmem:[#allocation3 + $0xe0] sm:$0xff]
    %v794 = vld [vmem:[#allocation3 + $0xe8] sm:$0xff]
    %v795 = vld [vmem:[#allocation3 + $0xf0] sm:$0xff]
    %v796 = vld [vmem:[#allocation3 + $0xf8] sm:$0xff]
    %v797 = vld [vmem:[#allocation3 + $0x100] sm:$0xff]
    %v798 = vld [vmem:[#allocation3 + $0x108] sm:$0xff]
    %v799 = vld [vmem:[#allocation3 + $0x110] sm:$0xff]
    %v800 = vld [vmem:[#allocation3 + $0x118] sm:$0xff]
    %v801 = vld [vmem:[#allocation3 + $0x120] sm:$0xff]
    %v802 = vld [vmem:[#allocation3 + $0x128] sm:$0xff]
    %v803 = vld [vmem:[#allocation3 + $0x130] sm:$0xff]
    %v804 = vld [vmem:[#allocation3 + $0x138] sm:$0xff]
    %v805 = vld [vmem:[#allocation3 + $0x140] sm:$0xff]
    %v806 = vld [vmem:[#allocation3 + $0x148] sm:$0xff]
    %v807 = vld [vmem:[#allocation3 + $0x150] sm:$0xff]
    %v808 = vld [vmem:[#allocation3 + $0x158] sm:$0xff]
    %v809 = vld [vmem:[#allocation3 + $0x160] sm:$0xff]
    %v810 = vld [vmem:[#allocation3 + $0x168] sm:$0xff]
    %v811 = vld [vmem:[#allocation3 + $0x170] sm:$0xff]
    %v812 = vld [vmem:[#allocation3 + $0x178] sm:$0xff]
    %813 = vmatpush.msra.mxu0 %v810
    %814 = vmatpush.msra.mxu0 %v807
    %815 = vmatpush.msra.mxu0 %v804
    %816 = vmatpush.msra.mxu0 %v801
    %817 = vmatpush.msra.mxu0 %v798
    %818 = vmatpush.msra.mxu0 %v795
    %819 = vmatpush.msra.mxu0 %v792
    %820 = vmatpush.msra.mxu0 %v789
    %821 = vmatpush.msra.mxu0 %v786
    %822 = vmatpush.msra.mxu0 %v783
    %823 = vmatpush.msra.mxu0 %v780
    %824 = vmatpush.msra.mxu0 %v777
    %825 = vmatpush.msra.mxu0 %v774
    %826 = vmatpush.msra.mxu0 %v771
    %827 = vmatpush.msra.mxu0 %v768
    %828 = vmatpush.msra.mxu0 %v765
    %829 = vmatmul.f32.gmra.mxu0 %v756
    %v830 = vpop.f32.mrf.mxu0
    %v831 = vadd.f32 0.0, %v830
    %832 = vdwg.mxu0
    %833 = vmatpush.msra.mxu0 %v811
    %834 = vmatpush.msra.mxu0 %v808
    %835 = vmatpush.msra.mxu0 %v805
    %836 = vmatpush.msra.mxu0 %v802
    %837 = vmatpush.msra.mxu0 %v799
    %838 = vmatpush.msra.mxu0 %v796
    %839 = vmatpush.msra.mxu0 %v793
    %840 = vmatpush.msra.mxu0 %v790
    %841 = vmatpush.msra.mxu0 %v787
    %842 = vmatpush.msra.mxu0 %v784
    %843 = vmatpush.msra.mxu0 %v781
    %844 = vmatpush.msra.mxu0 %v778
    %845 = vmatpush.msra.mxu0 %v775
    %846 = vmatpush.msra.mxu0 %v772
    %847 = vmatpush.msra.mxu0 %v769
    %848 = vmatpush.msra.mxu0 %v766
    %849 = vmatmul.f32.gmra.mxu0 %v756
    %v850 = vpop.f32.mrf.mxu0
    %v851 = vadd.f32 0.0, %v850
    %852 = vdwg.mxu0
    %853 = vmatpush.msra.mxu0 %v812
    %854 = vmatpush.msra.mxu0 %v809
    %855 = vmatpush.msra.mxu0 %v806
    %856 = vmatpush.msra.mxu0 %v803
    %857 = vmatpush.msra.mxu0 %v800
    %858 = vmatpush.msra.mxu0 %v797
    %859 = vmatpush.msra.mxu0 %v794
    %860 = vmatpush.msra.mxu0 %v791
    %861 = vmatpush.msra.mxu0 %v788
    %862 = vmatpush.msra.mxu0 %v785
    %863 = vmatpush.msra.mxu0 %v782
    %864 = vmatpush.msra.mxu0 %v779
    %865 = vmatpush.msra.mxu0 %v776
    %866 = vmatpush.msra.mxu0 %v773
    %867 = vmatpush.msra.mxu0 %v770
    %868 = vmatpush.msra.mxu0 %v767
    %869 = vmatmul.f32.gmra.mxu0 %v756
    %v870 = vpop.f32.mrf.mxu0
    %v871 = vadd.f32 0.0, %v870
    %872 = vdwg.mxu0
    %v873 = vadd.f32 %v762, %v831
    %v874 = vadd.f32 %v763, %v851
    %v875 = vxor.u32 %v873, 2147483648
    %v876 = vxor.u32 %v874, 2147483648
    %v877 = vmul.f32 %v875, 1.442695
    %v878 = vpow.pop %v877
    %v879 = vmul.f32 %v876, 1.442695
    %v880 = vpow.pop %v879
    %v881 = vadd.f32 %v878, 1.0
    %v882 = vadd.f32 %v880, 1.0
    %v883 = vrcp.pop %v881
    %v884 = vmul.f32 %v881, %v883
    %v885 = vsub.f32 1.0, %v884
    %v886 = vmul.f32 %v883, %v885
    %v887 = vadd.f32 %v883, %v886
    %vm888 = vweird.f32 %v881
    %vm889 = vweird.f32 %v883
    %vm890 = vmor %vm888, %vm889
    %v891 = vsel %vm890, %v883, %v887
    %v892 = vand.u32 2147483647, %v881
    %vm893 = vcmp.eq.f32.partialorder %v892, 8.507059e+37
    %v894 = vand.u32 %v881, 2147483648
    %v895 = vor.u32 1.1754944e-38, %v894
    %v896 = vsel %vm893, %v895, %v891
    %v897 = vmul.f32 1.0, %v896
    %v898 = vrcp.pop %v882
    %v899 = vmul.f32 %v882, %v898
    %v900 = vsub.f32 1.0, %v899
    %v901 = vmul.f32 %v898, %v900
    %v902 = vadd.f32 %v898, %v901
    %vm903 = vweird.f32 %v882
    %vm904 = vweird.f32 %v898
    %vm905 = vmor %vm903, %vm904
    %v906 = vsel %vm905, %v898, %v902
    %v907 = vand.u32 2147483647, %v882
    %vm908 = vcmp.eq.f32.partialorder %v907, 8.507059e+37
    %v909 = vand.u32 %v882, 2147483648
    %v910 = vor.u32 1.1754944e-38, %v909
    %v911 = vsel %vm908, %v910, %v906
    %v912 = vmul.f32 1.0, %v911
    %v913 = vadd.f32 %v871, %v427
    %v914 = vmul.f32 %v897, %v913
    %v915 = vadd.f32 %v764, %v914
    %v916 = vtanh.pop %v915
    %v917 = vsub.f32 1.0, %v912
    %v918 = vmul.f32 %v917, %v916
    %v919 = vmul.f32 %v912, %v756
    %v920 = vadd.f32 %v918, %v919
    %v921 = vtanh.pop %v920
    %s922 = scalar_lea.vmem [#allocation6], 16
    %923 = vst [vmem:[%s922] sm:$0xff] %v921
    %s924 = smul.u32 3, 3
    %s925 = smul.addr %s924, 8
    %s926 = scalar_lea.vmem [#allocation2], %s925
    %v927 = vld [vmem:[%s926] sm:$0xff]
    %v928 = vld [vmem:[%s926 + $0x8] sm:$0xff]
    %v929 = vld [vmem:[%s926 + $0x10] sm:$0xff]
    %v930 = vld [vmem:[#allocation3] sm:$0xff]
    %v931 = vld [vmem:[#allocation3 + $0x8] sm:$0xff]
    %v932 = vld [vmem:[#allocation3 + $0x10] sm:$0xff]
    %v933 = vld [vmem:[#allocation3 + $0x18] sm:$0xff]
    %v934 = vld [vmem:[#allocation3 + $0x20] sm:$0xff]
    %v935 = vld [vmem:[#allocation3 + $0x28] sm:$0xff]
    %v936 = vld [vmem:[#allocation3 + $0x30] sm:$0xff]
    %v937 = vld [vmem:[#allocation3 + $0x38] sm:$0xff]
    %v938 = vld [vmem:[#allocation3 + $0x40] sm:$0xff]
    %v939 = vld [vmem:[#allocation3 + $0x48] sm:$0xff]
    %v940 = vld [vmem:[#allocation3 + $0x50] sm:$0xff]
    %v941 = vld [vmem:[#allocation3 + $0x58] sm:$0xff]
    %v942 = vld [vmem:[#allocation3 + $0x60] sm:$0xff]
    %v943 = vld [vmem:[#allocation3 + $0x68] sm:$0xff]
    %v944 = vld [vmem:[#allocation3 + $0x70] sm:$0xff]
    %v945 = vld [vmem:[#allocation3 + $0x78] sm:$0xff]
    %v946 = vld [vmem:[#allocation3 + $0x80] sm:$0xff]
    %v947 = vld [vmem:[#allocation3 + $0x88] sm:$0xff]
    %v948 = vld [vmem:[#allocation3 + $0x90] sm:$0xff]
    %v949 = vld [vmem:[#allocation3 + $0x98] sm:$0xff]
    %v950 = vld [vmem:[#allocation3 + $0xa0] sm:$0xff]
    %v951 = vld [vmem:[#allocation3 + $0xa8] sm:$0xff]
    %v952 = vld [vmem:[#allocation3 + $0xb0] sm:$0xff]
    %v953 = vld [vmem:[#allocation3 + $0xb8] sm:$0xff]
    %v954 = vld [vmem:[#allocation3 + $0xc0] sm:$0xff]
    %v955 = vld [vmem:[#allocation3 + $0xc8] sm:$0xff]
    %v956 = vld [vmem:[#allocation3 + $0xd0] sm:$0xff]
    %v957 = vld [vmem:[#allocation3 + $0xd8] sm:$0xff]
    %v958 = vld [vmem:[#allocation3 + $0xe0] sm:$0xff]
    %v959 = vld [vmem:[#allocation3 + $0xe8] sm:$0xff]
    %v960 = vld [vmem:[#allocation3 + $0xf0] sm:$0xff]
    %v961 = vld [vmem:[#allocation3 + $0xf8] sm:$0xff]
    %v962 = vld [vmem:[#allocation3 + $0x100] sm:$0xff]
    %v963 = vld [vmem:[#allocation3 + $0x108] sm:$0xff]
    %v964 = vld [vmem:[#allocation3 + $0x110] sm:$0xff]
    %v965 = vld [vmem:[#allocation3 + $0x118] sm:$0xff]
    %v966 = vld [vmem:[#allocation3 + $0x120] sm:$0xff]
    %v967 = vld [vmem:[#allocation3 + $0x128] sm:$0xff]
    %v968 = vld [vmem:[#allocation3 + $0x130] sm:$0xff]
    %v969 = vld [vmem:[#allocation3 + $0x138] sm:$0xff]
    %v970 = vld [vmem:[#allocation3 + $0x140] sm:$0xff]
    %v971 = vld [vmem:[#allocation3 + $0x148] sm:$0xff]
    %v972 = vld [vmem:[#allocation3 + $0x150] sm:$0xff]
    %v973 = vld [vmem:[#allocation3 + $0x158] sm:$0xff]
    %v974 = vld [vmem:[#allocation3 + $0x160] sm:$0xff]
    %v975 = vld [vmem:[#allocation3 + $0x168] sm:$0xff]
    %v976 = vld [vmem:[#allocation3 + $0x170] sm:$0xff]
    %v977 = vld [vmem:[#allocation3 + $0x178] sm:$0xff]
    %978 = vmatpush.msra.mxu0 %v975
    %979 = vmatpush.msra.mxu0 %v972
    %980 = vmatpush.msra.mxu0 %v969
    %981 = vmatpush.msra.mxu0 %v966
    %982 = vmatpush.msra.mxu0 %v963
    %983 = vmatpush.msra.mxu0 %v960
    %984 = vmatpush.msra.mxu0 %v957
    %985 = vmatpush.msra.mxu0 %v954
    %986 = vmatpush.msra.mxu0 %v951
    %987 = vmatpush.msra.mxu0 %v948
    %988 = vmatpush.msra.mxu0 %v945
    %989 = vmatpush.msra.mxu0 %v942
    %990 = vmatpush.msra.mxu0 %v939
    %991 = vmatpush.msra.mxu0 %v936
    %992 = vmatpush.msra.mxu0 %v933
    %993 = vmatpush.msra.mxu0 %v930
    %994 = vmatmul.f32.gmra.mxu0 %v921
    %v995 = vpop.f32.mrf.mxu0
    %v996 = vadd.f32 0.0, %v995
    %997 = vdwg.mxu0
    %998 = vmatpush.msra.mxu0 %v976
    %999 = vmatpush.msra.mxu0 %v973
    %1000 = vmatpush.msra.mxu0 %v970
    %1001 = vmatpush.msra.mxu0 %v967
    %1002 = vmatpush.msra.mxu0 %v964
    %1003 = vmatpush.msra.mxu0 %v961
    %1004 = vmatpush.msra.mxu0 %v958
    %1005 = vmatpush.msra.mxu0 %v955
    %1006 = vmatpush.msra.mxu0 %v952
    %1007 = vmatpush.msra.mxu0 %v949
    %1008 = vmatpush.msra.mxu0 %v946
    %1009 = vmatpush.msra.mxu0 %v943
    %1010 = vmatpush.msra.mxu0 %v940
    %1011 = vmatpush.msra.mxu0 %v937
    %1012 = vmatpush.msra.mxu0 %v934
    %1013 = vmatpush.msra.mxu0 %v931
    %1014 = vmatmul.f32.gmra.mxu0 %v921
    %v1015 = vpop.f32.mrf.mxu0
    %v1016 = vadd.f32 0.0, %v1015
    %1017 = vdwg.mxu0
    %1018 = vmatpush.msra.mxu0 %v977
    %1019 = vmatpush.msra.mxu0 %v974
    %1020 = vmatpush.msra.mxu0 %v971
    %1021 = vmatpush.msra.mxu0 %v968
    %1022 = vmatpush.msra.mxu0 %v965
    %1023 = vmatpush.msra.mxu0 %v962
    %1024 = vmatpush.msra.mxu0 %v959
    %1025 = vmatpush.msra.mxu0 %v956
    %1026 = vmatpush.msra.mxu0 %v953
    %1027 = vmatpush.msra.mxu0 %v950
    %1028 = vmatpush.msra.mxu0 %v947
    %1029 = vmatpush.msra.mxu0 %v944
    %1030 = vmatpush.msra.mxu0 %v941
    %1031 = vmatpush.msra.mxu0 %v938
    %1032 = vmatpush.msra.mxu0 %v935
    %1033 = vmatpush.msra.mxu0 %v932
    %1034 = vmatmul.f32.gmra.mxu0 %v921
    %v1035 = vpop.f32.mrf.mxu0
    %v1036 = vadd.f32 0.0, %v1035
    %1037 = vdwg.mxu0
    %v1038 = vadd.f32 %v927, %v996
    %v1039 = vadd.f32 %v928, %v1016
    %v1040 = vxor.u32 %v1038, 2147483648
    %v1041 = vxor.u32 %v1039, 2147483648
    %v1042 = vmul.f32 %v1040, 1.442695
    %v1043 = vpow.pop %v1042
    %v1044 = vmul.f32 %v1041, 1.442695
    %v1045 = vpow.pop %v1044
    %v1046 = vadd.f32 %v1043, 1.0
    %v1047 = vadd.f32 %v1045, 1.0
    %v1048 = vrcp.pop %v1046
    %v1049 = vmul.f32 %v1046, %v1048
    %v1050 = vsub.f32 1.0, %v1049
    %v1051 = vmul.f32 %v1048, %v1050
    %v1052 = vadd.f32 %v1048, %v1051
    %vm1053 = vweird.f32 %v1046
    %vm1054 = vweird.f32 %v1048
    %vm1055 = vmor %vm1053, %vm1054
    %v1056 = vsel %vm1055, %v1048, %v1052
    %v1057 = vand.u32 2147483647, %v1046
    %vm1058 = vcmp.eq.f32.partialorder %v1057, 8.507059e+37
    %v1059 = vand.u32 %v1046, 2147483648
    %v1060 = vor.u32 1.1754944e-38, %v1059
    %v1061 = vsel %vm1058, %v1060, %v1056
    %v1062 = vmul.f32 1.0, %v1061
    %v1063 = vrcp.pop %v1047
    %v1064 = vmul.f32 %v1047, %v1063
    %v1065 = vsub.f32 1.0, %v1064
    %v1066 = vmul.f32 %v1063, %v1065
    %v1067 = vadd.f32 %v1063, %v1066
    %vm1068 = vweird.f32 %v1047
    %vm1069 = vweird.f32 %v1063
    %vm1070 = vmor %vm1068, %vm1069
    %v1071 = vsel %vm1070, %v1063, %v1067
    %v1072 = vand.u32 2147483647, %v1047
    %vm1073 = vcmp.eq.f32.partialorder %v1072, 8.507059e+37
    %v1074 = vand.u32 %v1047, 2147483648
    %v1075 = vor.u32 1.1754944e-38, %v1074
    %v1076 = vsel %vm1073, %v1075, %v1071
    %v1077 = vmul.f32 1.0, %v1076
    %v1078 = vadd.f32 %v1036, %v427
    %v1079 = vmul.f32 %v1062, %v1078
    %v1080 = vadd.f32 %v929, %v1079
    %v1081 = vtanh.pop %v1080
    %v1082 = vsub.f32 1.0, %v1077
    %v1083 = vmul.f32 %v1082, %v1081
    %v1084 = vmul.f32 %v1077, %v921
    %v1085 = vadd.f32 %v1083, %v1084
    %v1086 = vtanh.pop %v1085
    %s1087 = scalar_lea.vmem [#allocation6], 24
    %1088 = vst [vmem:[%s1087] sm:$0xff] %v1086
    %s1089 = smul.u32 4, 3
    %s1090 = smul.addr %s1089, 8
    %s1091 = scalar_lea.vmem [#allocation2], %s1090
    %v1092 = vld [vmem:[%s1091] sm:$0xff]
    %v1093 = vld [vmem:[%s1091 + $0x8] sm:$0xff]
    %v1094 = vld [vmem:[%s1091 + $0x10] sm:$0xff]
    %v1095 = vld [vmem:[#allocation3] sm:$0xff]
    %v1096 = vld [vmem:[#allocation3 + $0x8] sm:$0xff]
    %v1097 = vld [vmem:[#allocation3 + $0x10] sm:$0xff]
    %v1098 = vld [vmem:[#allocation3 + $0x18] sm:$0xff]
    %v1099 = vld [vmem:[#allocation3 + $0x20] sm:$0xff]
    %v1100 = vld [vmem:[#allocation3 + $0x28] sm:$0xff]
    %v1101 = vld [vmem:[#allocation3 + $0x30] sm:$0xff]
    %v1102 = vld [vmem:[#allocation3 + $0x38] sm:$0xff]
    %v1103 = vld [vmem:[#allocation3 + $0x40] sm:$0xff]
    %v1104 = vld [vmem:[#allocation3 + $0x48] sm:$0xff]
    %v1105 = vld [vmem:[#allocation3 + $0x50] sm:$0xff]
    %v1106 = vld [vmem:[#allocation3 + $0x58] sm:$0xff]
    %v1107 = vld [vmem:[#allocation3 + $0x60] sm:$0xff]
    %v1108 = vld [vmem:[#allocation3 + $0x68] sm:$0xff]
    %v1109 = vld [vmem:[#allocation3 + $0x70] sm:$0xff]
    %v1110 = vld [vmem:[#allocation3 + $0x78] sm:$0xff]
    %v1111 = vld [vmem:[#allocation3 + $0x80] sm:$0xff]
    %v1112 = vld [vmem:[#allocation3 + $0x88] sm:$0xff]
    %v1113 = vld [vmem:[#allocation3 + $0x90] sm:$0xff]
    %v1114 = vld [vmem:[#allocation3 + $0x98] sm:$0xff]
    %v1115 = vld [vmem:[#allocation3 + $0xa0] sm:$0xff]
    %v1116 = vld [vmem:[#allocation3 + $0xa8] sm:$0xff]
    %v1117 = vld [vmem:[#allocation3 + $0xb0] sm:$0xff]
    %v1118 = vld [vmem:[#allocation3 + $0xb8] sm:$0xff]
    %v1119 = vld [vmem:[#allocation3 + $0xc0] sm:$0xff]
    %v1120 = vld [vmem:[#allocation3 + $0xc8] sm:$0xff]
    %v1121 = vld [vmem:[#allocation3 + $0xd0] sm:$0xff]
    %v1122 = vld [vmem:[#allocation3 + $0xd8] sm:$0xff]
    %v1123 = vld [vmem:[#allocation3 + $0xe0] sm:$0xff]
    %v1124 = vld [vmem:[#allocation3 + $0xe8] sm:$0xff]
    %v1125 = vld [vmem:[#allocation3 + $0xf0] sm:$0xff]
    %v1126 = vld [vmem:[#allocation3 + $0xf8] sm:$0xff]
    %v1127 = vld [vmem:[#allocation3 + $0x100] sm:$0xff]
    %v1128 = vld [vmem:[#allocation3 + $0x108] sm:$0xff]
    %v1129 = vld [vmem:[#allocation3 + $0x110] sm:$0xff]
    %v1130 = vld [vmem:[#allocation3 + $0x118] sm:$0xff]
    %v1131 = vld [vmem:[#allocation3 + $0x120] sm:$0xff]
    %v1132 = vld [vmem:[#allocation3 + $0x128] sm:$0xff]
    %v1133 = vld [vmem:[#allocation3 + $0x130] sm:$0xff]
    %v1134 = vld [vmem:[#allocation3 + $0x138] sm:$0xff]
    %v1135 = vld [vmem:[#allocation3 + $0x140] sm:$0xff]
    %v1136 = vld [vmem:[#allocation3 + $0x148] sm:$0xff]
    %v1137 = vld [vmem:[#allocation3 + $0x150] sm:$0xff]
    %v1138 = vld [vmem:[#allocation3 + $0x158] sm:$0xff]
    %v1139 = vld [vmem:[#allocation3 + $0x160] sm:$0xff]
    %v1140 = vld [vmem:[#allocation3 + $0x168] sm:$0xff]
    %v1141 = vld [vmem:[#allocation3 + $0x170] sm:$0xff]
    %v1142 = vld [vmem:[#allocation3 + $0x178] sm:$0xff]
    %1143 = vmatpush.msra.mxu0 %v1140
    %1144 = vmatpush.msra.mxu0 %v1137
    %1145 = vmatpush.msra.mxu0 %v1134
    %1146 = vmatpush.msra.mxu0 %v1131
    %1147 = vmatpush.msra.mxu0 %v1128
    %1148 = vmatpush.msra.mxu0 %v1125
    %1149 = vmatpush.msra.mxu0 %v1122
    %1150 = vmatpush.msra.mxu0 %v1119
    %1151 = vmatpush.msra.mxu0 %v1116
    %1152 = vmatpush.msra.mxu0 %v1113
    %1153 = vmatpush.msra.mxu0 %v1110
    %1154 = vmatpush.msra.mxu0 %v1107
    %1155 = vmatpush.msra.mxu0 %v1104
    %1156 = vmatpush.msra.mxu0 %v1101
    %1157 = vmatpush.msra.mxu0 %v1098
    %1158 = vmatpush.msra.mxu0 %v1095
    %1159 = vmatmul.f32.gmra.mxu0 %v1086
    %v1160 = vpop.f32.mrf.mxu0
    %v1161 = vadd.f32 0.0, %v1160
    %1162 = vdwg.mxu0
    %1163 = vmatpush.msra.mxu0 %v1141
    %1164 = vmatpush.msra.mxu0 %v1138
    %1165 = vmatpush.msra.mxu0 %v1135
    %1166 = vmatpush.msra.mxu0 %v1132
    %1167 = vmatpush.msra.mxu0 %v1129
    %1168 = vmatpush.msra.mxu0 %v1126
    %1169 = vmatpush.msra.mxu0 %v1123
    %1170 = vmatpush.msra.mxu0 %v1120
    %1171 = vmatpush.msra.mxu0 %v1117
    %1172 = vmatpush.msra.mxu0 %v1114
    %1173 = vmatpush.msra.mxu0 %v1111
    %1174 = vmatpush.msra.mxu0 %v1108
    %1175 = vmatpush.msra.mxu0 %v1105
    %1176 = vmatpush.msra.mxu0 %v1102
    %1177 = vmatpush.msra.mxu0 %v1099
    %1178 = vmatpush.msra.mxu0 %v1096
    %1179 = vmatmul.f32.gmra.mxu0 %v1086
    %v1180 = vpop.f32.mrf.mxu0
    %v1181 = vadd.f32 0.0, %v1180
    %1182 = vdwg.mxu0
    %1183 = vmatpush.msra.mxu0 %v1142
    %1184 = vmatpush.msra.mxu0 %v1139
    %1185 = vmatpush.msra.mxu0 %v1136
    %1186 = vmatpush.msra.mxu0 %v1133
    %1187 = vmatpush.msra.mxu0 %v1130
    %1188 = vmatpush.msra.mxu0 %v1127
    %1189 = vmatpush.msra.mxu0 %v1124
    %1190 = vmatpush.msra.mxu0 %v1121
    %1191 = vmatpush.msra.mxu0 %v1118
    %1192 = vmatpush.msra.mxu0 %v1115
    %1193 = vmatpush.msra.mxu0 %v1112
    %1194 = vmatpush.msra.mxu0 %v1109
    %1195 = vmatpush.msra.mxu0 %v1106
    %1196 = vmatpush.msra.mxu0 %v1103
    %1197 = vmatpush.msra.mxu0 %v1100
    %1198 = vmatpush.msra.mxu0 %v1097
    %1199 = vmatmul.f32.gmra.mxu0 %v1086
    %v1200 = vpop.f32.mrf.mxu0
    %v1201 = vadd.f32 0.0, %v1200
    %1202 = vdwg.mxu0
    %v1203 = vadd.f32 %v1092, %v1161
    %v1204 = vadd.f32 %v1093, %v1181
    %v1205 = vxor.u32 %v1203, 2147483648
    %v1206 = vxor.u32 %v1204, 2147483648
    %v1207 = vmul.f32 %v1205, 1.442695
    %v1208 = vpow.pop %v1207
    %v1209 = vmul.f32 %v1206, 1.442695
    %v1210 = vpow.pop %v1209
    %v1211 = vadd.f32 %v1208, 1.0
    %v1212 = vadd.f32 %v1210, 1.0
    %v1213 = vrcp.pop %v1211
    %v1214 = vmul.f32 %v1211, %v1213
    %v1215 = vsub.f32 1.0, %v1214
    %v1216 = vmul.f32 %v1213, %v1215
    %v1217 = vadd.f32 %v1213, %v1216
    %vm1218 = vweird.f32 %v1211
    %vm1219 = vweird.f32 %v1213
    %vm1220 = vmor %vm1218, %vm1219
    %v1221 = vsel %vm1220, %v1213, %v1217
    %v1222 = vand.u32 2147483647, %v1211
    %vm1223 = vcmp.eq.f32.partialorder %v1222, 8.507059e+37
    %v1224 = vand.u32 %v1211, 2147483648
    %v1225 = vor.u32 1.1754944e-38, %v1224
    %v1226 = vsel %vm1223, %v1225, %v1221
    %v1227 = vmul.f32 1.0, %v1226
    %v1228 = vrcp.pop %v1212
    %v1229 = vmul.f32 %v1212, %v1228
    %v1230 = vsub.f32 1.0, %v1229
    %v1231 = vmul.f32 %v1228, %v1230
    %v1232 = vadd.f32 %v1228, %v1231
    %vm1233 = vweird.f32 %v1212
    %vm1234 = vweird.f32 %v1228
    %vm1235 = vmor %vm1233, %vm1234
    %v1236 = vsel %vm1235, %v1228, %v1232
    %v1237 = vand.u32 2147483647, %v1212
    %vm1238 = vcmp.eq.f32.partialorder %v1237, 8.507059e+37
    %v1239 = vand.u32 %v1212, 2147483648
    %v1240 = vor.u32 1.1754944e-38, %v1239
    %v1241 = vsel %vm1238, %v1240, %v1236
    %v1242 = vmul.f32 1.0, %v1241
    %v1243 = vadd.f32 %v1201, %v427
    %v1244 = vmul.f32 %v1227, %v1243
    %v1245 = vadd.f32 %v1094, %v1244
    %v1246 = vtanh.pop %v1245
    %v1247 = vsub.f32 1.0, %v1242
    %v1248 = vmul.f32 %v1247, %v1246
    %v1249 = vmul.f32 %v1242, %v1086
    %v1250 = vadd.f32 %v1248, %v1249
    %v1251 = vtanh.pop %v1250
    %s1252 = scalar_lea.vmem [#allocation6], 32
    %1253 = vst [vmem:[%s1252] sm:$0xff] %v1251
    %s1254 = smul.u32 5, 3
    %s1255 = smul.addr %s1254, 8
    %s1256 = scalar_lea.vmem [#allocation2], %s1255
    %v1257 = vld [vmem:[%s1256] sm:$0xff]
    %v1258 = vld [vmem:[%s1256 + $0x8] sm:$0xff]
    %v1259 = vld [vmem:[%s1256 + $0x10] sm:$0xff]
    %v1260 = vld [vmem:[#allocation3] sm:$0xff]
    %v1261 = vld [vmem:[#allocation3 + $0x8] sm:$0xff]
    %v1262 = vld [vmem:[#allocation3 + $0x10] sm:$0xff]
    %v1263 = vld [vmem:[#allocation3 + $0x18] sm:$0xff]
    %v1264 = vld [vmem:[#allocation3 + $0x20] sm:$0xff]
    %v1265 = vld [vmem:[#allocation3 + $0x28] sm:$0xff]
    %v1266 = vld [vmem:[#allocation3 + $0x30] sm:$0xff]
    %v1267 = vld [vmem:[#allocation3 + $0x38] sm:$0xff]
    %v1268 = vld [vmem:[#allocation3 + $0x40] sm:$0xff]
    %v1269 = vld [vmem:[#allocation3 + $0x48] sm:$0xff]
    %v1270 = vld [vmem:[#allocation3 + $0x50] sm:$0xff]
    %v1271 = vld [vmem:[#allocation3 + $0x58] sm:$0xff]
    %v1272 = vld [vmem:[#allocation3 + $0x60] sm:$0xff]
    %v1273 = vld [vmem:[#allocation3 + $0x68] sm:$0xff]
    %v1274 = vld [vmem:[#allocation3 + $0x70] sm:$0xff]
    %v1275 = vld [vmem:[#allocation3 + $0x78] sm:$0xff]
    %v1276 = vld [vmem:[#allocation3 + $0x80] sm:$0xff]
    %v1277 = vld [vmem:[#allocation3 + $0x88] sm:$0xff]
    %v1278 = vld [vmem:[#allocation3 + $0x90] sm:$0xff]
    %v1279 = vld [vmem:[#allocation3 + $0x98] sm:$0xff]
    %v1280 = vld [vmem:[#allocation3 + $0xa0] sm:$0xff]
    %v1281 = vld [vmem:[#allocation3 + $0xa8] sm:$0xff]
    %v1282 = vld [vmem:[#allocation3 + $0xb0] sm:$0xff]
    %v1283 = vld [vmem:[#allocation3 + $0xb8] sm:$0xff]
    %v1284 = vld [vmem:[#allocation3 + $0xc0] sm:$0xff]
    %v1285 = vld [vmem:[#allocation3 + $0xc8] sm:$0xff]
    %v1286 = vld [vmem:[#allocation3 + $0xd0] sm:$0xff]
    %v1287 = vld [vmem:[#allocation3 + $0xd8] sm:$0xff]
    %v1288 = vld [vmem:[#allocation3 + $0xe0] sm:$0xff]
    %v1289 = vld [vmem:[#allocation3 + $0xe8] sm:$0xff]
    %v1290 = vld [vmem:[#allocation3 + $0xf0] sm:$0xff]
    %v1291 = vld [vmem:[#allocation3 + $0xf8] sm:$0xff]
    %v1292 = vld [vmem:[#allocation3 + $0x100] sm:$0xff]
    %v1293 = vld [vmem:[#allocation3 + $0x108] sm:$0xff]
    %v1294 = vld [vmem:[#allocation3 + $0x110] sm:$0xff]
    %v1295 = vld [vmem:[#allocation3 + $0x118] sm:$0xff]
    %v1296 = vld [vmem:[#allocation3 + $0x120] sm:$0xff]
    %v1297 = vld [vmem:[#allocation3 + $0x128] sm:$0xff]
    %v1298 = vld [vmem:[#allocation3 + $0x130] sm:$0xff]
    %v1299 = vld [vmem:[#allocation3 + $0x138] sm:$0xff]
    %v1300 = vld [vmem:[#allocation3 + $0x140] sm:$0xff]
    %v1301 = vld [vmem:[#allocation3 + $0x148] sm:$0xff]
    %v1302 = vld [vmem:[#allocation3 + $0x150] sm:$0xff]
    %v1303 = vld [vmem:[#allocation3 + $0x158] sm:$0xff]
    %v1304 = vld [vmem:[#allocation3 + $0x160] sm:$0xff]
    %v1305 = vld [vmem:[#allocation3 + $0x168] sm:$0xff]
    %v1306 = vld [vmem:[#allocation3 + $0x170] sm:$0xff]
    %v1307 = vld [vmem:[#allocation3 + $0x178] sm:$0xff]
    %1308 = vmatpush.msra.mxu0 %v1305
    %1309 = vmatpush.msra.mxu0 %v1302
    %1310 = vmatpush.msra.mxu0 %v1299
    %1311 = vmatpush.msra.mxu0 %v1296
    %1312 = vmatpush.msra.mxu0 %v1293
    %1313 = vmatpush.msra.mxu0 %v1290
    %1314 = vmatpush.msra.mxu0 %v1287
    %1315 = vmatpush.msra.mxu0 %v1284
    %1316 = vmatpush.msra.mxu0 %v1281
    %1317 = vmatpush.msra.mxu0 %v1278
    %1318 = vmatpush.msra.mxu0 %v1275
    %1319 = vmatpush.msra.mxu0 %v1272
    %1320 = vmatpush.msra.mxu0 %v1269
    %1321 = vmatpush.msra.mxu0 %v1266
    %1322 = vmatpush.msra.mxu0 %v1263
    %1323 = vmatpush.msra.mxu0 %v1260
    %1324 = vmatmul.f32.gmra.mxu0 %v1251
    %v1325 = vpop.f32.mrf.mxu0
    %v1326 = vadd.f32 0.0, %v1325
    %1327 = vdwg.mxu0
    %1328 = vmatpush.msra.mxu0 %v1306
    %1329 = vmatpush.msra.mxu0 %v1303
    %1330 = vmatpush.msra.mxu0 %v1300
    %1331 = vmatpush.msra.mxu0 %v1297
    %1332 = vmatpush.msra.mxu0 %v1294
    %1333 = vmatpush.msra.mxu0 %v1291
    %1334 = vmatpush.msra.mxu0 %v1288
    %1335 = vmatpush.msra.mxu0 %v1285
    %1336 = vmatpush.msra.mxu0 %v1282
    %1337 = vmatpush.msra.mxu0 %v1279
    %1338 = vmatpush.msra.mxu0 %v1276
    %1339 = vmatpush.msra.mxu0 %v1273
    %1340 = vmatpush.msra.mxu0 %v1270
    %1341 = vmatpush.msra.mxu0 %v1267
    %1342 = vmatpush.msra.mxu0 %v1264
    %1343 = vmatpush.msra.mxu0 %v1261
    %1344 = vmatmul.f32.gmra.mxu0 %v1251
    %v1345 = vpop.f32.mrf.mxu0
    %v1346 = vadd.f32 0.0, %v1345
    %1347 = vdwg.mxu0
    %1348 = vmatpush.msra.mxu0 %v1307
    %1349 = vmatpush.msra.mxu0 %v1304
    %1350 = vmatpush.msra.mxu0 %v1301
    %1351 = vmatpush.msra.mxu0 %v1298
    %1352 = vmatpush.msra.mxu0 %v1295
    %1353 = vmatpush.msra.mxu0 %v1292
    %1354 = vmatpush.msra.mxu0 %v1289
    %1355 = vmatpush.msra.mxu0 %v1286
    %1356 = vmatpush.msra.mxu0 %v1283
    %1357 = vmatpush.msra.mxu0 %v1280
    %1358 = vmatpush.msra.mxu0 %v1277
    %1359 = vmatpush.msra.mxu0 %v1274
    %1360 = vmatpush.msra.mxu0 %v1271
    %1361 = vmatpush.msra.mxu0 %v1268
    %1362 = vmatpush.msra.mxu0 %v1265
    %1363 = vmatpush.msra.mxu0 %v1262
    %1364 = vmatmul.f32.gmra.mxu0 %v1251
    %v1365 = vpop.f32.mrf.mxu0
    %v1366 = vadd.f32 0.0, %v1365
    %1367 = vdwg.mxu0
    %v1368 = vadd.f32 %v1257, %v1326
    %v1369 = vadd.f32 %v1258, %v1346
    %v1370 = vxor.u32 %v1368, 2147483648
    %v1371 = vxor.u32 %v1369, 2147483648
    %v1372 = vmul.f32 %v1370, 1.442695
    %v1373 = vpow.pop %v1372
    %v1374 = vmul.f32 %v1371, 1.442695
    %v1375 = vpow.pop %v1374
    %v1376 = vadd.f32 %v1373, 1.0
    %v1377 = vadd.f32 %v1375, 1.0
    %v1378 = vrcp.pop %v1376
    %v1379 = vmul.f32 %v1376, %v1378
    %v1380 = vsub.f32 1.0, %v1379
    %v1381 = vmul.f32 %v1378, %v1380
    %v1382 = vadd.f32 %v1378, %v1381
    %vm1383 = vweird.f32 %v1376
    %vm1384 = vweird.f32 %v1378
    %vm1385 = vmor %vm1383, %vm1384
    %v1386 = vsel %vm1385, %v1378, %v1382
    %v1387 = vand.u32 2147483647, %v1376
    %vm1388 = vcmp.eq.f32.partialorder %v1387, 8.507059e+37
    %v1389 = vand.u32 %v1376, 2147483648
    %v1390 = vor.u32 1.1754944e-38, %v1389
    %v1391 = vsel %vm1388, %v1390, %v1386
    %v1392 = vmul.f32 1.0, %v1391
    %v1393 = vrcp.pop %v1377
    %v1394 = vmul.f32 %v1377, %v1393
    %v1395 = vsub.f32 1.0, %v1394
    %v1396 = vmul.f32 %v1393, %v1395
    %v1397 = vadd.f32 %v1393, %v1396
    %vm1398 = vweird.f32 %v1377
    %vm1399 = vweird.f32 %v1393
    %vm1400 = vmor %vm1398, %vm1399
    %v1401 = vsel %vm1400, %v1393, %v1397
    %v1402 = vand.u32 2147483647, %v1377
    %vm1403 = vcmp.eq.f32.partialorder %v1402, 8.507059e+37
    %v1404 = vand.u32 %v1377, 2147483648
    %v1405 = vor.u32 1.1754944e-38, %v1404
    %v1406 = vsel %vm1403, %v1405, %v1401
    %v1407 = vmul.f32 1.0, %v1406
    %v1408 = vadd.f32 %v1366, %v427
    %v1409 = vmul.f32 %v1392, %v1408
    %v1410 = vadd.f32 %v1259, %v1409
    %v1411 = vtanh.pop %v1410
    %v1412 = vsub.f32 1.0, %v1407
    %v1413 = vmul.f32 %v1412, %v1411
    %v1414 = vmul.f32 %v1407, %v1251
    %v1415 = vadd.f32 %v1413, %v1414
    %v1416 = vtanh.pop %v1415
    %s1417 = scalar_lea.vmem [#allocation6], 40
    %1418 = vst [vmem:[%s1417] sm:$0xff] %v1416
    %s1419 = smul.u32 6, 3
    %s1420 = smul.addr %s1419, 8
    %s1421 = scalar_lea.vmem [#allocation2], %s1420
    %v1422 = vld [vmem:[%s1421] sm:$0xff]
    %v1423 = vld [vmem:[%s1421 + $0x8] sm:$0xff]
    %v1424 = vld [vmem:[%s1421 + $0x10] sm:$0xff]
    %v1425 = vld [vmem:[#allocation3] sm:$0xff]
    %v1426 = vld [vmem:[#allocation3 + $0x8] sm:$0xff]
    %v1427 = vld [vmem:[#allocation3 + $0x10] sm:$0xff]
    %v1428 = vld [vmem:[#allocation3 + $0x18] sm:$0xff]
    %v1429 = vld [vmem:[#allocation3 + $0x20] sm:$0xff]
    %v1430 = vld [vmem:[#allocation3 + $0x28] sm:$0xff]
    %v1431 = vld [vmem:[#allocation3 + $0x30] sm:$0xff]
    %v1432 = vld [vmem:[#allocation3 + $0x38] sm:$0xff]
    %v1433 = vld [vmem:[#allocation3 + $0x40] sm:$0xff]
    %v1434 = vld [vmem:[#allocation3 + $0x48] sm:$0xff]
    %v1435 = vld [vmem:[#allocation3 + $0x50] sm:$0xff]
    %v1436 = vld [vmem:[#allocation3 + $0x58] sm:$0xff]
    %v1437 = vld [vmem:[#allocation3 + $0x60] sm:$0xff]
    %v1438 = vld [vmem:[#allocation3 + $0x68] sm:$0xff]
    %v1439 = vld [vmem:[#allocation3 + $0x70] sm:$0xff]
    %v1440 = vld [vmem:[#allocation3 + $0x78] sm:$0xff]
    %v1441 = vld [vmem:[#allocation3 + $0x80] sm:$0xff]
    %v1442 = vld [vmem:[#allocation3 + $0x88] sm:$0xff]
    %v1443 = vld [vmem:[#allocation3 + $0x90] sm:$0xff]
    %v1444 = vld [vmem:[#allocation3 + $0x98] sm:$0xff]
    %v1445 = vld [vmem:[#allocation3 + $0xa0] sm:$0xff]
    %v1446 = vld [vmem:[#allocation3 + $0xa8] sm:$0xff]
    %v1447 = vld [vmem:[#allocation3 + $0xb0] sm:$0xff]
    %v1448 = vld [vmem:[#allocation3 + $0xb8] sm:$0xff]
    %v1449 = vld [vmem:[#allocation3 + $0xc0] sm:$0xff]
    %v1450 = vld [vmem:[#allocation3 + $0xc8] sm:$0xff]
    %v1451 = vld [vmem:[#allocation3 + $0xd0] sm:$0xff]
    %v1452 = vld [vmem:[#allocation3 + $0xd8] sm:$0xff]
    %v1453 = vld [vmem:[#allocation3 + $0xe0] sm:$0xff]
    %v1454 = vld [vmem:[#allocation3 + $0xe8] sm:$0xff]
    %v1455 = vld [vmem:[#allocation3 + $0xf0] sm:$0xff]
    %v1456 = vld [vmem:[#allocation3 + $0xf8] sm:$0xff]
    %v1457 = vld [vmem:[#allocation3 + $0x100] sm:$0xff]
    %v1458 = vld [vmem:[#allocation3 + $0x108] sm:$0xff]
    %v1459 = vld [vmem:[#allocation3 + $0x110] sm:$0xff]
    %v1460 = vld [vmem:[#allocation3 + $0x118] sm:$0xff]
    %v1461 = vld [vmem:[#allocation3 + $0x120] sm:$0xff]
    %v1462 = vld [vmem:[#allocation3 + $0x128] sm:$0xff]
    %v1463 = vld [vmem:[#allocation3 + $0x130] sm:$0xff]
    %v1464 = vld [vmem:[#allocation3 + $0x138] sm:$0xff]
    %v1465 = vld [vmem:[#allocation3 + $0x140] sm:$0xff]
    %v1466 = vld [vmem:[#allocation3 + $0x148] sm:$0xff]
    %v1467 = vld [vmem:[#allocation3 + $0x150] sm:$0xff]
    %v1468 = vld [vmem:[#allocation3 + $0x158] sm:$0xff]
    %v1469 = vld [vmem:[#allocation3 + $0x160] sm:$0xff]
    %v1470 = vld [vmem:[#allocation3 + $0x168] sm:$0xff]
    %v1471 = vld [vmem:[#allocation3 + $0x170] sm:$0xff]
    %v1472 = vld [vmem:[#allocation3 + $0x178] sm:$0xff]
    %1473 = vmatpush.msra.mxu0 %v1470
    %1474 = vmatpush.msra.mxu0 %v1467
    %1475 = vmatpush.msra.mxu0 %v1464
    %1476 = vmatpush.msra.mxu0 %v1461
    %1477 = vmatpush.msra.mxu0 %v1458
    %1478 = vmatpush.msra.mxu0 %v1455
    %1479 = vmatpush.msra.mxu0 %v1452
    %1480 = vmatpush.msra.mxu0 %v1449
    %1481 = vmatpush.msra.mxu0 %v1446
    %1482 = vmatpush.msra.mxu0 %v1443
    %1483 = vmatpush.msra.mxu0 %v1440
    %1484 = vmatpush.msra.mxu0 %v1437
    %1485 = vmatpush.msra.mxu0 %v1434
    %1486 = vmatpush.msra.mxu0 %v1431
    %1487 = vmatpush.msra.mxu0 %v1428
    %1488 = vmatpush.msra.mxu0 %v1425
    %1489 = vmatmul.f32.gmra.mxu0 %v1416
    %v1490 = vpop.f32.mrf.mxu0
    %v1491 = vadd.f32 0.0, %v1490
    %1492 = vdwg.mxu0
    %1493 = vmatpush.msra.mxu0 %v1471
    %1494 = vmatpush.msra.mxu0 %v1468
    %1495 = vmatpush.msra.mxu0 %v1465
    %1496 = vmatpush.msra.mxu0 %v1462
    %1497 = vmatpush.msra.mxu0 %v1459
    %1498 = vmatpush.msra.mxu0 %v1456
    %1499 = vmatpush.msra.mxu0 %v1453
    %1500 = vmatpush.msra.mxu0 %v1450
    %1501 = vmatpush.msra.mxu0 %v1447
    %1502 = vmatpush.msra.mxu0 %v1444
    %1503 = vmatpush.msra.mxu0 %v1441
    %1504 = vmatpush.msra.mxu0 %v1438
    %1505 = vmatpush.msra.mxu0 %v1435
    %1506 = vmatpush.msra.mxu0 %v1432
    %1507 = vmatpush.msra.mxu0 %v1429
    %1508 = vmatpush.msra.mxu0 %v1426
    %1509 = vmatmul.f32.gmra.mxu0 %v1416
    %v1510 = vpop.f32.mrf.mxu0
    %v1511 = vadd.f32 0.0, %v1510
    %1512 = vdwg.mxu0
    %1513 = vmatpush.msra.mxu0 %v1472
    %1514 = vmatpush.msra.mxu0 %v1469
    %1515 = vmatpush.msra.mxu0 %v1466
    %1516 = vmatpush.msra.mxu0 %v1463
    %1517 = vmatpush.msra.mxu0 %v1460
    %1518 = vmatpush.msra.mxu0 %v1457
    %1519 = vmatpush.msra.mxu0 %v1454
    %1520 = vmatpush.msra.mxu0 %v1451
    %1521 = vmatpush.msra.mxu0 %v1448
    %1522 = vmatpush.msra.mxu0 %v1445
    %1523 = vmatpush.msra.mxu0 %v1442
    %1524 = vmatpush.msra.mxu0 %v1439
    %1525 = vmatpush.msra.mxu0 %v1436
    %1526 = vmatpush.msra.mxu0 %v1433
    %1527 = vmatpush.msra.mxu0 %v1430
    %1528 = vmatpush.msra.mxu0 %v1427
    %1529 = vmatmul.f32.gmra.mxu0 %v1416
    %v1530 = vpop.f32.mrf.mxu0
    %v1531 = vadd.f32 0.0, %v1530
    %1532 = vdwg.mxu0
    %v1533 = vadd.f32 %v1422, %v1491
    %v1534 = vadd.f32 %v1423, %v1511
    %v1535 = vxor.u32 %v1533, 2147483648
    %v1536 = vxor.u32 %v1534, 2147483648
    %v1537 = vmul.f32 %v1535, 1.442695
    %v1538 = vpow.pop %v1537
    %v1539 = vmul.f32 %v1536, 1.442695
    %v1540 = vpow.pop %v1539
    %v1541 = vadd.f32 %v1538, 1.0
    %v1542 = vadd.f32 %v1540, 1.0
    %v1543 = vrcp.pop %v1541
    %v1544 = vmul.f32 %v1541, %v1543
    %v1545 = vsub.f32 1.0, %v1544
    %v1546 = vmul.f32 %v1543, %v1545
    %v1547 = vadd.f32 %v1543, %v1546
    %vm1548 = vweird.f32 %v1541
    %vm1549 = vweird.f32 %v1543
    %vm1550 = vmor %vm1548, %vm1549
    %v1551 = vsel %vm1550, %v1543, %v1547
    %v1552 = vand.u32 2147483647, %v1541
    %vm1553 = vcmp.eq.f32.partialorder %v1552, 8.507059e+37
    %v1554 = vand.u32 %v1541, 2147483648
    %v1555 = vor.u32 1.1754944e-38, %v1554
    %v1556 = vsel %vm1553, %v1555, %v1551
    %v1557 = vmul.f32 1.0, %v1556
    %v1558 = vrcp.pop %v1542
    %v1559 = vmul.f32 %v1542, %v1558
    %v1560 = vsub.f32 1.0, %v1559
    %v1561 = vmul.f32 %v1558, %v1560
    %v1562 = vadd.f32 %v1558, %v1561
    %vm1563 = vweird.f32 %v1542
    %vm1564 = vweird.f32 %v1558
    %vm1565 = vmor %vm1563, %vm1564
    %v1566 = vsel %vm1565, %v1558, %v1562
    %v1567 = vand.u32 2147483647, %v1542
    %vm1568 = vcmp.eq.f32.partialorder %v1567, 8.507059e+37
    %v1569 = vand.u32 %v1542, 2147483648
    %v1570 = vor.u32 1.1754944e-38, %v1569
    %v1571 = vsel %vm1568, %v1570, %v1566
    %v1572 = vmul.f32 1.0, %v1571
    %v1573 = vadd.f32 %v1531, %v427
    %v1574 = vmul.f32 %v1557, %v1573
    %v1575 = vadd.f32 %v1424, %v1574
    %v1576 = vtanh.pop %v1575
    %v1577 = vsub.f32 1.0, %v1572
    %v1578 = vmul.f32 %v1577, %v1576
    %v1579 = vmul.f32 %v1572, %v1416
    %v1580 = vadd.f32 %v1578, %v1579
    %v1581 = vtanh.pop %v1580
    %s1582 = scalar_lea.vmem [#allocation6], 48
    %1583 = vst [vmem:[%s1582] sm:$0xff] %v1581
    %s1584 = smul.u32 7, 3
    %s1585 = smul.addr %s1584, 8
    %s1586 = scalar_lea.vmem [#allocation2], %s1585
    %v1587 = vld [vmem:[%s1586] sm:$0xff]
    %v1588 = vld [vmem:[%s1586 + $0x8] sm:$0xff]
    %v1589 = vld [vmem:[%s1586 + $0x10] sm:$0xff]
    %v1590 = vld [vmem:[#allocation3] sm:$0xff]
    %v1591 = vld [vmem:[#allocation3 + $0x8] sm:$0xff]
    %v1592 = vld [vmem:[#allocation3 + $0x10] sm:$0xff]
    %v1593 = vld [vmem:[#allocation3 + $0x18] sm:$0xff]
    %v1594 = vld [vmem:[#allocation3 + $0x20] sm:$0xff]
    %v1595 = vld [vmem:[#allocation3 + $0x28] sm:$0xff]
    %v1596 = vld [vmem:[#allocation3 + $0x30] sm:$0xff]
    %v1597 = vld [vmem:[#allocation3 + $0x38] sm:$0xff]
    %v1598 = vld [vmem:[#allocation3 + $0x40] sm:$0xff]
    %v1599 = vld [vmem:[#allocation3 + $0x48] sm:$0xff]
    %v1600 = vld [vmem:[#allocation3 + $0x50] sm:$0xff]
    %v1601 = vld [vmem:[#allocation3 + $0x58] sm:$0xff]
    %v1602 = vld [vmem:[#allocation3 + $0x60] sm:$0xff]
    %v1603 = vld [vmem:[#allocation3 + $0x68] sm:$0xff]
    %v1604 = vld [vmem:[#allocation3 + $0x70] sm:$0xff]
    %v1605 = vld [vmem:[#allocation3 + $0x78] sm:$0xff]
    %v1606 = vld [vmem:[#allocation3 + $0x80] sm:$0xff]
    %v1607 = vld [vmem:[#allocation3 + $0x88] sm:$0xff]
    %v1608 = vld [vmem:[#allocation3 + $0x90] sm:$0xff]
    %v1609 = vld [vmem:[#allocation3 + $0x98] sm:$0xff]
    %v1610 = vld [vmem:[#allocation3 + $0xa0] sm:$0xff]
    %v1611 = vld [vmem:[#allocation3 + $0xa8] sm:$0xff]
    %v1612 = vld [vmem:[#allocation3 + $0xb0] sm:$0xff]
    %v1613 = vld [vmem:[#allocation3 + $0xb8] sm:$0xff]
    %v1614 = vld [vmem:[#allocation3 + $0xc0] sm:$0xff]
    %v1615 = vld [vmem:[#allocation3 + $0xc8] sm:$0xff]
    %v1616 = vld [vmem:[#allocation3 + $0xd0] sm:$0xff]
    %v1617 = vld [vmem:[#allocation3 + $0xd8] sm:$0xff]
    %v1618 = vld [vmem:[#allocation3 + $0xe0] sm:$0xff]
    %v1619 = vld [vmem:[#allocation3 + $0xe8] sm:$0xff]
    %v1620 = vld [vmem:[#allocation3 + $0xf0] sm:$0xff]
    %v1621 = vld [vmem:[#allocation3 + $0xf8] sm:$0xff]
    %v1622 = vld [vmem:[#allocation3 + $0x100] sm:$0xff]
    %v1623 = vld [vmem:[#allocation3 + $0x108] sm:$0xff]
    %v1624 = vld [vmem:[#allocation3 + $0x110] sm:$0xff]
    %v1625 = vld [vmem:[#allocation3 + $0x118] sm:$0xff]
    %v1626 = vld [vmem:[#allocation3 + $0x120] sm:$0xff]
    %v1627 = vld [vmem:[#allocation3 + $0x128] sm:$0xff]
    %v1628 = vld [vmem:[#allocation3 + $0x130] sm:$0xff]
    %v1629 = vld [vmem:[#allocation3 + $0x138] sm:$0xff]
    %v1630 = vld [vmem:[#allocation3 + $0x140] sm:$0xff]
    %v1631 = vld [vmem:[#allocation3 + $0x148] sm:$0xff]
    %v1632 = vld [vmem:[#allocation3 + $0x150] sm:$0xff]
    %v1633 = vld [vmem:[#allocation3 + $0x158] sm:$0xff]
    %v1634 = vld [vmem:[#allocation3 + $0x160] sm:$0xff]
    %v1635 = vld [vmem:[#allocation3 + $0x168] sm:$0xff]
    %v1636 = vld [vmem:[#allocation3 + $0x170] sm:$0xff]
    %v1637 = vld [vmem:[#allocation3 + $0x178] sm:$0xff]
    %1638 = vmatpush.msra.mxu0 %v1635
    %1639 = vmatpush.msra.mxu0 %v1632
    %1640 = vmatpush.msra.mxu0 %v1629
    %1641 = vmatpush.msra.mxu0 %v1626
    %1642 = vmatpush.msra.mxu0 %v1623
    %1643 = vmatpush.msra.mxu0 %v1620
    %1644 = vmatpush.msra.mxu0 %v1617
    %1645 = vmatpush.msra.mxu0 %v1614
    %1646 = vmatpush.msra.mxu0 %v1611
    %1647 = vmatpush.msra.mxu0 %v1608
    %1648 = vmatpush.msra.mxu0 %v1605
    %1649 = vmatpush.msra.mxu0 %v1602
    %1650 = vmatpush.msra.mxu0 %v1599
    %1651 = vmatpush.msra.mxu0 %v1596
    %1652 = vmatpush.msra.mxu0 %v1593
    %1653 = vmatpush.msra.mxu0 %v1590
    %1654 = vmatmul.f32.gmra.mxu0 %v1581
    %v1655 = vpop.f32.mrf.mxu0
    %v1656 = vadd.f32 0.0, %v1655
    %1657 = vdwg.mxu0
    %1658 = vmatpush.msra.mxu0 %v1636
    %1659 = vmatpush.msra.mxu0 %v1633
    %1660 = vmatpush.msra.mxu0 %v1630
    %1661 = vmatpush.msra.mxu0 %v1627
    %1662 = vmatpush.msra.mxu0 %v1624
    %1663 = vmatpush.msra.mxu0 %v1621
    %1664 = vmatpush.msra.mxu0 %v1618
    %1665 = vmatpush.msra.mxu0 %v1615
    %1666 = vmatpush.msra.mxu0 %v1612
    %1667 = vmatpush.msra.mxu0 %v1609
    %1668 = vmatpush.msra.mxu0 %v1606
    %1669 = vmatpush.msra.mxu0 %v1603
    %1670 = vmatpush.msra.mxu0 %v1600
    %1671 = vmatpush.msra.mxu0 %v1597
    %1672 = vmatpush.msra.mxu0 %v1594
    %1673 = vmatpush.msra.mxu0 %v1591
    %1674 = vmatmul.f32.gmra.mxu0 %v1581
    %v1675 = vpop.f32.mrf.mxu0
    %v1676 = vadd.f32 0.0, %v1675
    %1677 = vdwg.mxu0
    %1678 = vmatpush.msra.mxu0 %v1637
    %1679 = vmatpush.msra.mxu0 %v1634
    %1680 = vmatpush.msra.mxu0 %v1631
    %1681 = vmatpush.msra.mxu0 %v1628
    %1682 = vmatpush.msra.mxu0 %v1625
    %1683 = vmatpush.msra.mxu0 %v1622
    %1684 = vmatpush.msra.mxu0 %v1619
    %1685 = vmatpush.msra.mxu0 %v1616
    %1686 = vmatpush.msra.mxu0 %v1613
    %1687 = vmatpush.msra.mxu0 %v1610
    %1688 = vmatpush.msra.mxu0 %v1607
    %1689 = vmatpush.msra.mxu0 %v1604
    %1690 = vmatpush.msra.mxu0 %v1601
    %1691 = vmatpush.msra.mxu0 %v1598
    %1692 = vmatpush.msra.mxu0 %v1595
    %1693 = vmatpush.msra.mxu0 %v1592
    %1694 = vmatmul.f32.gmra.mxu0 %v1581
    %v1695 = vpop.f32.mrf.mxu0
    %v1696 = vadd.f32 0.0, %v1695
    %1697 = vdwg.mxu0
    %v1698 = vadd.f32 %v1587, %v1656
    %v1699 = vadd.f32 %v1588, %v1676
    %v1700 = vxor.u32 %v1698, 2147483648
    %v1701 = vxor.u32 %v1699, 2147483648
    %v1702 = vmul.f32 %v1700, 1.442695
    %v1703 = vpow.pop %v1702
    %v1704 = vmul.f32 %v1701, 1.442695
    %v1705 = vpow.pop %v1704
    %v1706 = vadd.f32 %v1703, 1.0
    %v1707 = vadd.f32 %v1705, 1.0
    %v1708 = vrcp.pop %v1706
    %v1709 = vmul.f32 %v1706, %v1708
    %v1710 = vsub.f32 1.0, %v1709
    %v1711 = vmul.f32 %v1708, %v1710
    %v1712 = vadd.f32 %v1708, %v1711
    %vm1713 = vweird.f32 %v1706
    %vm1714 = vweird.f32 %v1708
    %vm1715 = vmor %vm1713, %vm1714
    %v1716 = vsel %vm1715, %v1708, %v1712
    %v1717 = vand.u32 2147483647, %v1706
    %vm1718 = vcmp.eq.f32.partialorder %v1717, 8.507059e+37
    %v1719 = vand.u32 %v1706, 2147483648
    %v1720 = vor.u32 1.1754944e-38, %v1719
    %v1721 = vsel %vm1718, %v1720, %v1716
    %v1722 = vmul.f32 1.0, %v1721
    %v1723 = vrcp.pop %v1707
    %v1724 = vmul.f32 %v1707, %v1723
    %v1725 = vsub.f32 1.0, %v1724
    %v1726 = vmul.f32 %v1723, %v1725
    %v1727 = vadd.f32 %v1723, %v1726
    %vm1728 = vweird.f32 %v1707
    %vm1729 = vweird.f32 %v1723
    %vm1730 = vmor %vm1728, %vm1729
    %v1731 = vsel %vm1730, %v1723, %v1727
    %v1732 = vand.u32 2147483647, %v1707
    %vm1733 = vcmp.eq.f32.partialorder %v1732, 8.507059e+37
    %v1734 = vand.u32 %v1707, 2147483648
    %v1735 = vor.u32 1.1754944e-38, %v1734
    %v1736 = vsel %vm1733, %v1735, %v1731
    %v1737 = vmul.f32 1.0, %v1736
    %v1738 = vadd.f32 %v1696, %v427
    %v1739 = vmul.f32 %v1722, %v1738
    %v1740 = vadd.f32 %v1589, %v1739
    %v1741 = vtanh.pop %v1740
    %v1742 = vsub.f32 1.0, %v1737
    %v1743 = vmul.f32 %v1742, %v1741
    %v1744 = vmul.f32 %v1737, %v1581
    %v1745 = vadd.f32 %v1743, %v1744
    %v1746 = vtanh.pop %v1745
    %s1747 = scalar_lea.vmem [#allocation6], 56
    %1748 = vst [vmem:[%s1747] sm:$0xff] %v1746
    // Predicated region
    $region38: #{tpu_custom_call.1} parent=1 // pred_check
      _
    $region39: #{tpu_custom_call.1} parent=1 // pred_check_branch
      %1750 = sbr.rel (0) target = $region41
    $region40: #{tpu_custom_call.1} parent=1 // pred_region
      %1752 = vsyncadd [#allocation5], 0
      %s1753 = sshll.u32 [#allocation6], 4
      %s1754 = int_to_ptr.vmem [resolvable:$true] %s1753
      %s1755 = sshll.u32 %s8, 4
      %s1756 = int_to_ptr.hbm [resolvable:$true] %s1755
      %1761 = dma.vmem_to_hbm [thread:$0]  %s1754, 1024, %s1756, [#allocation5], 128, 128, 8
    $region41: #{tpu_custom_call.1} parent=1 // pred_fallthru
      _
    // Predicated region
    $region42: #{tpu_custom_call.1} parent=1 // pred_check
      _
    $region43: #{tpu_custom_call.1} parent=1 // pred_check_branch
      %1763 = sbr.rel (0) target = $region45
    $region44: #{tpu_custom_call.1} parent=1 // pred_region
      %1765 = dma.done [#allocation5], 1024
    $region45: #{tpu_custom_call.1} parent=1 // pred_fallthru
      _
    %1766 = vsyncpa [#allocation4], 1
    %1767 = vsyncpa [#allocation5], 1

</llo_original>
